<compile_context>
chip_gen: v6e
topology: v6e:2x2x1
jax: 0.10.0
libtpu: 0.0.40
codegen_flags: <defaults>
</compile_context>

<pallas_src>
import jax
import jax.numpy as jnp
from jax.experimental import pallas as pl
from jax.experimental.pallas import tpu as pltpu


_MEAN = (-0.03, -0.088, -0.188)
_STD = (0.458, 0.448, 0.45)


# ------------------------------ Pallas kernel ------------------------------ #

def _make_conv_kernel(cout, H, W, F_out, G_out, emit_next, emit_norm, eps,
                      precision):
    """Fused 3x3 conv + bias + ReLU + interior mask (+ channel L2-norm).

    Activations are flattened padded frames.  The output frame has F_out lanes;
    image pixel (h, w) sits at lane G_out + h*Wp + w.  The input frame has
    F_in = F_out + 2*(Wp+1) lanes, so tap (kh, kw) of the 3x3 conv is the
    static slice x[:, kh*Wp+kw : kh*Wp+kw + F_out] and the conv output is
    produced at full output-frame width -> one unmasked full-width store.
    Non-interior lanes are zeroed with an in-kernel iota mask.
    """
    Wp = W + 2

    def compute_masked_act(x_ref, w_ref, b_ref):
        x = x_ref[0]                                    # (Cin, F_in)
        acc = None
        for kh in range(3):                             # 9 accumulated matmuls
            for kw in range(3):
                t = kh * 3 + kw
                s = kh * Wp + kw                        # static lane offset
                tap = x[:, s:s + F_out]                 # (Cin, F_out)
                d = jnp.dot(w_ref[t], tap,
                            preferred_element_type=jnp.float32,
                            precision=precision)
                acc = d if acc is None else acc + d     # init from first tap
        act = jnp.maximum(acc + b_ref[...], 0.0)        # (Cout, F_out) f32

        # Interior mask generated in-kernel (cheap VPU iota; no HBM mask input).
        lane = jax.lax.broadcasted_iota(jnp.int32, (1, F_out), 1)
        m = lane - G_out                                # flat pixel index h*Wp+w
        col_shift = (-G_out) % Wp                       # keep the mod non-negative
        col = (lane + col_shift) % Wp                   # == m mod Wp
        interior = (m >= 0) & (m < H * Wp) & (col < W)
        return act * interior.astype(jnp.float32)       # zero halo/margin lanes

    def write_norm(norm_ref, masked):
        # normalize_activation fused into the epilogue:
        #   x / (sqrt(sum_c x^2) + eps); reciprocal via EUP + one Newton step.
        ssq = jnp.sum(masked * masked, axis=0, keepdims=True)   # (1, F_out)
        denom = jnp.sqrt(ssq) + eps
        r = pl.reciprocal(denom, approx=True)
        r = r * (2.0 - denom * r)                       # ~f32-exact 1/denom
        norm_ref[0] = masked * r                        # single full-width store

    if emit_next and emit_norm:
        def kernel(x_ref, w_ref, b_ref, next_ref, norm_ref):
            masked = compute_masked_act(x_ref, w_ref, b_ref)
            next_ref[0] = masked.astype(next_ref.dtype)  # single full-width store
            write_norm(norm_ref, masked)
    elif emit_next:
        def kernel(x_ref, w_ref, b_ref, next_ref):
            masked = compute_masked_act(x_ref, w_ref, b_ref)
            next_ref[0] = masked.astype(next_ref.dtype)
    elif emit_norm:
        def kernel(x_ref, w_ref, b_ref, norm_ref):
            masked = compute_masked_act(x_ref, w_ref, b_ref)
            write_norm(norm_ref, masked)
    else:
        raise ValueError("kernel must emit at least one output")
    return kernel


def conv3x3_relu_fused(act, w_taps, bias, *, H, W, emit_next, emit_norm,
                       eps=1e-10, compute_dtype=jnp.bfloat16):
    """act: (N, Cin, F_in) padded-frame activations; w_taps: (9, Cout, Cin)."""
    N, cin, F_in = act.shape
    Wp = W + 2
    HpWp = (H + 2) * Wp
    off = Wp + 1
    F_out = F_in - 2 * off
    assert F_out >= HpWp and (F_out - HpWp) % 2 == 0
    e_out = (F_out - HpWp) // 2          # extra margin lanes on each side
    G_out = off + e_out                  # lane of image pixel (0, 0)
    nine, cout, cin_w = w_taps.shape
    assert nine == 9 and cin_w == cin
    assert act.dtype == jnp.dtype(compute_dtype)
    assert w_taps.dtype == jnp.dtype(compute_dtype)

    is_f32 = jnp.dtype(compute_dtype) == jnp.dtype(jnp.float32)
    precision = jax.lax.Precision.HIGHEST if is_f32 else None
    kernel = _make_conv_kernel(cout, H, W, F_out, G_out, emit_next, emit_norm,
                               eps, precision)

    in_specs = [
        pl.BlockSpec((1, cin, F_in), lambda n: (n, 0, 0)),
        # grid-invariant operands (constant index_map); see Buffered(1) TODO.
        pl.BlockSpec((9, cout, cin), lambda n: (0, 0, 0)),
        pl.BlockSpec((cout, 1), lambda n: (0, 0)),
    ]

    out_shape, out_specs = [], []
    if emit_next:   # consumed only as MXU input by the next layer -> bf16
        out_shape.append(jax.ShapeDtypeStruct((N, cout, F_out), compute_dtype))
        out_specs.append(pl.BlockSpec((1, cout, F_out), lambda n: (n, 0, 0)))
    if emit_norm:   # returned activation stays f32
        out_shape.append(jax.ShapeDtypeStruct((N, cout, F_out), jnp.float32))
        out_specs.append(pl.BlockSpec((1, cout, F_out), lambda n: (n, 0, 0)))

    # scoped-VMEM budget from the actual (double-buffered) block footprints
    isz = jnp.dtype(compute_dtype).itemsize
    blk = 2 * (cin * F_in * isz + 9 * cout * cin * isz + cout * 4)
    if emit_next:
        blk += 2 * cout * F_out * isz
    if emit_norm:
        blk += 2 * cout * F_out * 4
    vmem_limit = int(min(64 * 1024 * 1024,
                         max(2 * blk + (1 << 20), 32 * 1024 * 1024)))

    outs = pl.pallas_call(
        kernel,
        grid=(N,),
        in_specs=in_specs,
        out_specs=tuple(out_specs),
        out_shape=tuple(out_shape),
        compiler_params=pltpu.CompilerParams(
            dimension_semantics=("parallel",),
            vmem_limit_bytes=vmem_limit),
    )(act, w_taps, bias)
    if not isinstance(outs, (tuple, list)):
        outs = (outs,)
    return tuple(outs)


# -------------------------------- JAX glue --------------------------------- #

def lpips_basenet_forward(x, conv_params, target_layers=(1, 2),
                          compute_dtype=jnp.bfloat16):
    """x: (N, 3, H, W) float32 NCHW.  Returns the channel-normalized activation
    of each target layer, each (N, Cout_i, H, W) float32."""
    N, C, H, W = x.shape
    Hp, Wp = H + 2, W + 2
    HpWp = Hp * Wp
    off = Wp + 1
    M = max(target_layers)               # deepest layer we must execute

    mean = jnp.array(_MEAN, jnp.float32)
    std = jnp.array(_STD, jnp.float32)

    # z_score folded into conv-1: pad the *raw* image halo with `mean` so that
    # conv'(mean-padded x) == conv(zero-padded z_score(x)) exactly.
    halo = jnp.broadcast_to(mean.reshape(1, C, 1, 1), (N, C, Hp, Wp))
    padded = halo.at[:, :, 1:1 + H, 1:1 + W].set(x).reshape(N, C, HpWp)
    # Extra `off` lanes of margin per remaining layer: lets every layer compute
    # and store its full output frame with a single unmasked store.  Margin
    # values never reach a surviving output (masked each layer) -> zero-fill.
    e_in = M * off
    act = jnp.pad(padded, ((0, 0), (0, 0), (e_in, e_in))).astype(compute_dtype)

    outputs = []
    for i, (wgt, bias) in enumerate(conv_params, 1):
        cout, cin = wgt.shape[0], wgt.shape[1]
        w, b = wgt.astype(jnp.float32), bias.astype(jnp.float32)
        if i == 1:  # fold (x - mean) / std into weights + bias (exact, in f32)
            b = b - jnp.sum(w * (mean / std)[None, :, None, None],
                            axis=(1, 2, 3))
            w = w / std[None, :, None, None]
        # (Cout, Cin, 3, 3) -> (9, Cout, Cin), tap index t = kh*3 + kw,
        # stored in HBM in the MXU feed dtype (bf16 by default).
        w_taps = jnp.transpose(w, (2, 3, 0, 1)).reshape(9, cout, cin)
        w_taps = w_taps.astype(compute_dtype)

        is_target = i in target_layers
        emit_next = i < M
        res = conv3x3_relu_fused(act, w_taps, b.reshape(cout, 1),
                                 H=H, W=W, emit_next=emit_next,
                                 emit_norm=is_target,
                                 compute_dtype=compute_dtype)
        e_out = e_in - off
        ri = 0
        if emit_next:
            act = res[ri]
            ri += 1
        if is_target:
            norm = res[ri]
            # free reshape + halo crop (layout is already N, C, ...)
            norm = norm[:, :, e_out:e_out + HpWp].reshape(N, cout, Hp, Wp)
            outputs.append(norm[:, :, 1:1 + H, 1:1 + W])
        e_in = e_out
        if len(outputs) == len(target_layers):
            break
    return outputs


# ---------------------------- pure-JAX reference ---------------------------- #

def _reference_forward(x, conv_params, target_layers=(1, 2)):
    mean = jnp.array(_MEAN, jnp.float32)[None, :, None, None]
    std = jnp.array(_STD, jnp.float32)[None, :, None, None]
    h = (x - mean) / std
    outs = []
    for i, (wgt, bias) in enumerate(conv_params, 1):
        h = jax.lax.conv_general_dilated(
            h, wgt, window_strides=(1, 1), padding="SAME",
            dimension_numbers=("NCHW", "OIHW", "NCHW"),
            precision=jax.lax.Precision.HIGHEST)
        h = jnp.maximum(h + bias[None, :, None, None], 0.0)
        if i in target_layers:
            norm = jnp.sqrt(jnp.sum(h * h, axis=1, keepdims=True))
            outs.append(h / (norm + 1e-10))
        if len(outs) == len(target_layers):
            break
    return outs


# ----------------------------------- main ----------------------------------- #

if __name__ == "__main__":
    key = jax.random.PRNGKey(0)
    k_x, k_w1, k_b1, k_w2, k_b2 = jax.random.split(key, 5)

    N, C, H, W = 2, 3, 16, 16
    x = jax.random.normal(k_x, (N, C, H, W), jnp.float32)

    # deterministic synthetic conv stack (OIHW weights, like torch Conv2d)
    w1 = 0.1 * jax.random.normal(k_w1, (8, 3, 3, 3), jnp.float32)
    b1 = 0.1 * jax.random.normal(k_b1, (8,), jnp.float32)
    w2 = 0.1 * jax.random.normal(k_w2, (16, 8, 3, 3), jnp.float32)
    b2 = 0.1 * jax.random.normal(k_b2, (16,), jnp.float32)
    params = [(w1, b1), (w2, b2)]

    refs = _reference_forward(x, params, target_layers=(1, 2))

    # Performance path: bf16 MXU feed + bf16 inter-layer activations (default).
    outs_bf16 = lpips_basenet_forward(x, params, target_layers=(1, 2),
                                      compute_dtype=jnp.bfloat16)
    outs_bf16 = [jax.block_until_ready(o) for o in outs_bf16]

    # Verification path: f32 feed, Precision.HIGHEST -> tight tolerance.
    outs_f32 = lpips_basenet_forward(x, params, target_layers=(1, 2),
                                     compute_dtype=jnp.float32)
    outs_f32 = [jax.block_until_ready(o) for o in outs_f32]

    assert len(outs_bf16) == len(outs_f32) == len(refs) == 2
    for o32, obf, r in zip(outs_f32, outs_bf16, refs):
        assert o32.shape == obf.shape == r.shape
        # f32 path: identical math to the reference up to MXU pass rounding.
        assert float(jnp.max(jnp.abs(o32 - r))) < 5e-4
        # bf16 path: operand rounding (~2^-9 relative) accumulated across two
        # conv layers; normalized outputs are O(1), so ~1e-2 worst-case abs.
        assert float(jnp.max(jnp.abs(obf - r))) < 3e-2
    print("KERNEL_OK")
</pallas_src>

<mosaic_0001>
module attributes {stable_mosaic.version = 11 : i64} {
  func.func @kernel(%arg0: i32, %arg1: memref<1x3x400xbf16, #tpu.memory_space<vmem>>, %arg2: memref<9x8x3xbf16, #tpu.memory_space<vmem>>, %arg3: memref<8x1xf32, #tpu.memory_space<vmem>>, %arg4: memref<1x8x362xbf16, #tpu.memory_space<vmem>>, %arg5: memref<1x8x362xf32, #tpu.memory_space<vmem>>) attributes {dimension_semantics = [#tpu.dimension_semantics<parallel>], iteration_bounds = array<i64: 2>, scalar_prefetch = 0 : i64, scratch_operands = 0 : i64, tpu.core_type = #tpu.core_type<tc>, window_params = [{transform_indices = @transform_0, window_bounds = array<i64: 1, 3, 400>}, {pipeline_mode = #tpu.pipeline_mode<synchronous>, transform_indices = @transform_1, window_bounds = array<i64: 9, 8, 3>}, {pipeline_mode = #tpu.pipeline_mode<synchronous>, transform_indices = @transform_2, window_bounds = array<i64: 8, 1>}, {transform_indices = @transform_3, window_bounds = array<i64: 1, 8, 362>}, {transform_indices = @transform_4, window_bounds = array<i64: 1, 8, 362>}]} {
    %c0 = arith.constant 0 : index
    %c0_0 = arith.constant 0 : index
    %c0_1 = arith.constant 0 : index
    %0 = vector.load %arg1[%c0, %c0_0, %c0_1] : memref<1x3x400xbf16, #tpu.memory_space<vmem>>, vector<1x3x400xbf16>
    %1 = vector.shape_cast %0 : vector<1x3x400xbf16> to vector<3x400xbf16>
    %2 = vector.extract_strided_slice %1 {offsets = [0, 0], sizes = [3, 362], strides = [1, 1]} : vector<3x400xbf16> to vector<3x362xbf16>
    %c0_2 = arith.constant 0 : index
    %c0_3 = arith.constant 0 : index
    %c0_4 = arith.constant 0 : index
    %3 = vector.load %arg2[%c0_2, %c0_3, %c0_4] : memref<9x8x3xbf16, #tpu.memory_space<vmem>>, vector<1x8x3xbf16>
    %4 = vector.shape_cast %3 : vector<1x8x3xbf16> to vector<8x3xbf16>
    %cst = arith.constant dense<0.000000e+00> : vector<8x362xf32>
    %5 = tpu.matmul %4, %2, %cst {dimension_numbers = #tpu.dot_dimension_numbers<[1], [0], [0], [1], [0, 0, 1, 1], [], []>} : vector<8x3xbf16>, vector<3x362xbf16>, vector<8x362xf32> -> vector<8x362xf32>
    %6 = vector.extract_strided_slice %1 {offsets = [0, 1], sizes = [3, 362], strides = [1, 1]} : vector<3x400xbf16> to vector<3x362xbf16>
    %c1 = arith.constant 1 : index
    %c0_5 = arith.constant 0 : index
    %c0_6 = arith.constant 0 : index
    %7 = vector.load %arg2[%c1, %c0_5, %c0_6] : memref<9x8x3xbf16, #tpu.memory_space<vmem>>, vector<1x8x3xbf16>
    %8 = vector.shape_cast %7 : vector<1x8x3xbf16> to vector<8x3xbf16>
    %cst_7 = arith.constant dense<0.000000e+00> : vector<8x362xf32>
    %9 = tpu.matmul %8, %6, %cst_7 {dimension_numbers = #tpu.dot_dimension_numbers<[1], [0], [0], [1], [0, 0, 1, 1], [], []>} : vector<8x3xbf16>, vector<3x362xbf16>, vector<8x362xf32> -> vector<8x362xf32>
    %10 = arith.addf %5, %9 : vector<8x362xf32>
    %11 = vector.extract_strided_slice %1 {offsets = [0, 2], sizes = [3, 362], strides = [1, 1]} : vector<3x400xbf16> to vector<3x362xbf16>
    %c2 = arith.constant 2 : index
    %c0_8 = arith.constant 0 : index
    %c0_9 = arith.constant 0 : index
    %12 = vector.load %arg2[%c2, %c0_8, %c0_9] : memref<9x8x3xbf16, #tpu.memory_space<vmem>>, vector<1x8x3xbf16>
    %13 = vector.shape_cast %12 : vector<1x8x3xbf16> to vector<8x3xbf16>
    %cst_10 = arith.constant dense<0.000000e+00> : vector<8x362xf32>
    %14 = tpu.matmul %13, %11, %cst_10 {dimension_numbers = #tpu.dot_dimension_numbers<[1], [0], [0], [1], [0, 0, 1, 1], [], []>} : vector<8x3xbf16>, vector<3x362xbf16>, vector<8x362xf32> -> vector<8x362xf32>
    %15 = arith.addf %10, %14 : vector<8x362xf32>
    %16 = vector.extract_strided_slice %1 {offsets = [0, 18], sizes = [3, 362], strides = [1, 1]} : vector<3x400xbf16> to vector<3x362xbf16>
    %c3 = arith.constant 3 : index
    %c0_11 = arith.constant 0 : index
    %c0_12 = arith.constant 0 : index
    %17 = vector.load %arg2[%c3, %c0_11, %c0_12] : memref<9x8x3xbf16, #tpu.memory_space<vmem>>, vector<1x8x3xbf16>
    %18 = vector.shape_cast %17 : vector<1x8x3xbf16> to vector<8x3xbf16>
    %cst_13 = arith.constant dense<0.000000e+00> : vector<8x362xf32>
    %19 = tpu.matmul %18, %16, %cst_13 {dimension_numbers = #tpu.dot_dimension_numbers<[1], [0], [0], [1], [0, 0, 1, 1], [], []>} : vector<8x3xbf16>, vector<3x362xbf16>, vector<8x362xf32> -> vector<8x362xf32>
    %20 = arith.addf %15, %19 : vector<8x362xf32>
    %21 = vector.extract_strided_slice %1 {offsets = [0, 19], sizes = [3, 362], strides = [1, 1]} : vector<3x400xbf16> to vector<3x362xbf16>
    %c4 = arith.constant 4 : index
    %c0_14 = arith.constant 0 : index
    %c0_15 = arith.constant 0 : index
    %22 = vector.load %arg2[%c4, %c0_14, %c0_15] : memref<9x8x3xbf16, #tpu.memory_space<vmem>>, vector<1x8x3xbf16>
    %23 = vector.shape_cast %22 : vector<1x8x3xbf16> to vector<8x3xbf16>
    %cst_16 = arith.constant dense<0.000000e+00> : vector<8x362xf32>
    %24 = tpu.matmul %23, %21, %cst_16 {dimension_numbers = #tpu.dot_dimension_numbers<[1], [0], [0], [1], [0, 0, 1, 1], [], []>} : vector<8x3xbf16>, vector<3x362xbf16>, vector<8x362xf32> -> vector<8x362xf32>
    %25 = arith.addf %20, %24 : vector<8x362xf32>
    %26 = vector.extract_strided_slice %1 {offsets = [0, 20], sizes = [3, 362], strides = [1, 1]} : vector<3x400xbf16> to vector<3x362xbf16>
    %c5 = arith.constant 5 : index
    %c0_17 = arith.constant 0 : index
    %c0_18 = arith.constant 0 : index
    %27 = vector.load %arg2[%c5, %c0_17, %c0_18] : memref<9x8x3xbf16, #tpu.memory_space<vmem>>, vector<1x8x3xbf16>
    %28 = vector.shape_cast %27 : vector<1x8x3xbf16> to vector<8x3xbf16>
    %cst_19 = arith.constant dense<0.000000e+00> : vector<8x362xf32>
    %29 = tpu.matmul %28, %26, %cst_19 {dimension_numbers = #tpu.dot_dimension_numbers<[1], [0], [0], [1], [0, 0, 1, 1], [], []>} : vector<8x3xbf16>, vector<3x362xbf16>, vector<8x362xf32> -> vector<8x362xf32>
    %30 = arith.addf %25, %29 : vector<8x362xf32>
    %31 = vector.extract_strided_slice %1 {offsets = [0, 36], sizes = [3, 362], strides = [1, 1]} : vector<3x400xbf16> to vector<3x362xbf16>
    %c6 = arith.constant 6 : index
    %c0_20 = arith.constant 0 : index
    %c0_21 = arith.constant 0 : index
    %32 = vector.load %arg2[%c6, %c0_20, %c0_21] : memref<9x8x3xbf16, #tpu.memory_space<vmem>>, vector<1x8x3xbf16>
    %33 = vector.shape_cast %32 : vector<1x8x3xbf16> to vector<8x3xbf16>
    %cst_22 = arith.constant dense<0.000000e+00> : vector<8x362xf32>
    %34 = tpu.matmul %33, %31, %cst_22 {dimension_numbers = #tpu.dot_dimension_numbers<[1], [0], [0], [1], [0, 0, 1, 1], [], []>} : vector<8x3xbf16>, vector<3x362xbf16>, vector<8x362xf32> -> vector<8x362xf32>
    %35 = arith.addf %30, %34 : vector<8x362xf32>
    %36 = vector.extract_strided_slice %1 {offsets = [0, 37], sizes = [3, 362], strides = [1, 1]} : vector<3x400xbf16> to vector<3x362xbf16>
    %c7 = arith.constant 7 : index
    %c0_23 = arith.constant 0 : index
    %c0_24 = arith.constant 0 : index
    %37 = vector.load %arg2[%c7, %c0_23, %c0_24] : memref<9x8x3xbf16, #tpu.memory_space<vmem>>, vector<1x8x3xbf16>
    %38 = vector.shape_cast %37 : vector<1x8x3xbf16> to vector<8x3xbf16>
    %cst_25 = arith.constant dense<0.000000e+00> : vector<8x362xf32>
    %39 = tpu.matmul %38, %36, %cst_25 {dimension_numbers = #tpu.dot_dimension_numbers<[1], [0], [0], [1], [0, 0, 1, 1], [], []>} : vector<8x3xbf16>, vector<3x362xbf16>, vector<8x362xf32> -> vector<8x362xf32>
    %40 = arith.addf %35, %39 : vector<8x362xf32>
    %41 = vector.extract_strided_slice %1 {offsets = [0, 38], sizes = [3, 362], strides = [1, 1]} : vector<3x400xbf16> to vector<3x362xbf16>
    %c8 = arith.constant 8 : index
    %c0_26 = arith.constant 0 : index
    %c0_27 = arith.constant 0 : index
    %42 = vector.load %arg2[%c8, %c0_26, %c0_27] : memref<9x8x3xbf16, #tpu.memory_space<vmem>>, vector<1x8x3xbf16>
    %43 = vector.shape_cast %42 : vector<1x8x3xbf16> to vector<8x3xbf16>
    %cst_28 = arith.constant dense<0.000000e+00> : vector<8x362xf32>
    %44 = tpu.matmul %43, %41, %cst_28 {dimension_numbers = #tpu.dot_dimension_numbers<[1], [0], [0], [1], [0, 0, 1, 1], [], []>} : vector<8x3xbf16>, vector<3x362xbf16>, vector<8x362xf32> -> vector<8x362xf32>
    %45 = arith.addf %40, %44 : vector<8x362xf32>
    %c0_29 = arith.constant 0 : index
    %c0_30 = arith.constant 0 : index
    %46 = vector.load %arg3[%c0_29, %c0_30] : memref<8x1xf32, #tpu.memory_space<vmem>>, vector<8x1xf32>
    %47 = vector.broadcast %46 : vector<8x1xf32> to vector<8x362xf32>
    %48 = arith.addf %45, %47 : vector<8x362xf32>
    %cst_31 = arith.constant 0.000000e+00 : f32
    %49 = vector.broadcast %cst_31 : f32 to vector<8x362xf32>
    %50 = arith.maximumf %48, %49 : vector<8x362xf32>
    %51 = tpu.iota {dimensions = array<i32: 1>} : vector<1x362xi32>
    %c38_i32 = arith.constant 38 : i32
    %52 = vector.broadcast %c38_i32 : i32 to vector<1x362xi32>
    %53 = arith.subi %51, %52 : vector<1x362xi32>
    %c16_i32 = arith.constant 16 : i32
    %54 = vector.broadcast %c16_i32 : i32 to vector<1x362xi32>
    %55 = arith.addi %51, %54 : vector<1x362xi32>
    %c18_i32 = arith.constant 18 : i32
    %c0_i32 = arith.constant 0 : i32
    %56 = arith.cmpi eq, %c18_i32, %c0_i32 : i32
    %c1_i32 = arith.constant 1 : i32
    %57 = arith.select %56, %c1_i32, %c18_i32 : i32
    %58 = vector.broadcast %57 : i32 to vector<1x362xi32>
    %59 = arith.remsi %55, %58 : vector<1x362xi32>
    %c0_i32_32 = arith.constant 0 : i32
    %60 = vector.broadcast %c0_i32_32 : i32 to vector<1x362xi32>
    %61 = arith.cmpi ne, %59, %60 : vector<1x362xi32>
    %c0_i32_33 = arith.constant 0 : i32
    %62 = vector.broadcast %c0_i32_33 : i32 to vector<1x362xi32>
    %63 = arith.cmpi slt, %59, %62 : vector<1x362xi32>
    %c0_i32_34 = arith.constant 0 : i32
    %64 = arith.cmpi slt, %57, %c0_i32_34 : i32
    %65 = vector.broadcast %64 : i1 to vector<1x362xi1>
    %66 = vector.broadcast %65 : vector<1x362xi1> to vector<1x362xi1>
    %67 = arith.xori %63, %66 : vector<1x362xi1>
    %68 = arith.andi %67, %61 : vector<1x362xi1>
    %69 = vector.broadcast %57 : i32 to vector<1x362xi32>
    %70 = arith.addi %59, %69 : vector<1x362xi32>
    %71 = arith.select %68, %70, %59 : vector<1x362xi1>, vector<1x362xi32>
    %c0_i32_35 = arith.constant 0 : i32
    %72 = vector.broadcast %c0_i32_35 : i32 to vector<1x362xi32>
    %73 = arith.cmpi sge, %53, %72 : vector<1x362xi32>
    %c288_i32 = arith.constant 288 : i32
    %74 = vector.broadcast %c288_i32 : i32 to vector<1x362xi32>
    %75 = arith.cmpi slt, %53, %74 : vector<1x362xi32>
    %76 = arith.andi %73, %75 : vector<1x362xi1>
    %c16_i32_36 = arith.constant 16 : i32
    %77 = vector.broadcast %c16_i32_36 : i32 to vector<1x362xi32>
    %78 = arith.cmpi slt, %71, %77 : vector<1x362xi32>
    %79 = arith.andi %76, %78 : vector<1x362xi1>
    %80 = arith.extui %79 : vector<1x362xi1> to vector<1x362xi32>
    %81 = arith.sitofp %80 : vector<1x362xi32> to vector<1x362xf32>
    %82 = vector.broadcast %81 : vector<1x362xf32> to vector<8x362xf32>
    %83 = arith.mulf %50, %82 : vector<8x362xf32>
    %84 = arith.truncf %83 : vector<8x362xf32> to vector<8x362xbf16>
    %c0_37 = arith.constant 0 : index
    %c0_38 = arith.constant 0 : index
    %c0_39 = arith.constant 0 : index
    %85 = vector.load %arg4[%c0_37, %c0_38, %c0_39] : memref<1x8x362xbf16, #tpu.memory_space<vmem>>, vector<1x8x362xbf16>
    %86 = vector.shape_cast %85 : vector<1x8x362xbf16> to vector<8x362xbf16>
    %87 = vector.shape_cast %84 : vector<8x362xbf16> to vector<1x8x362xbf16>
    tpu.vector_store %arg4[%c0_37, %c0_38, %c0_39], %87 {strides = array<i32>} : memref<1x8x362xbf16, #tpu.memory_space<vmem>>, vector<1x8x362xbf16>,
    %88 = arith.mulf %83, %83 : vector<8x362xf32>
    %cst_40 = arith.constant dense<0.000000e+00> : vector<362xf32>
    %89 = vector.multi_reduction <add>, %88, %cst_40 [0] : vector<8x362xf32> to vector<362xf32>
    %90 = vector.shape_cast %89 : vector<362xf32> to vector<1x362xf32>
    %91 = math.sqrt %90 : vector<1x362xf32>
    %cst_41 = arith.constant 1.000000e-10 : f32
    %92 = vector.broadcast %cst_41 : f32 to vector<1x362xf32>
    %93 = arith.addf %91, %92 : vector<1x362xf32>
    %94 = tpu.reciprocal %93 {approx = true} : vector<1x362xf32> -> vector<1x362xf32>
    %95 = arith.mulf %93, %94 : vector<1x362xf32>
    %cst_42 = arith.constant 2.000000e+00 : f32
    %96 = vector.broadcast %cst_42 : f32 to vector<1x362xf32>
    %97 = arith.subf %96, %95 : vector<1x362xf32>
    %98 = arith.mulf %94, %97 : vector<1x362xf32>
    %99 = vector.broadcast %98 : vector<1x362xf32> to vector<8x362xf32>
    %100 = arith.mulf %83, %99 : vector<8x362xf32>
    %c0_43 = arith.constant 0 : index
    %c0_44 = arith.constant 0 : index
    %c0_45 = arith.constant 0 : index
    %101 = vector.load %arg5[%c0_43, %c0_44, %c0_45] : memref<1x8x362xf32, #tpu.memory_space<vmem>>, vector<1x8x362xf32>
    %102 = vector.shape_cast %101 : vector<1x8x362xf32> to vector<8x362xf32>
    %103 = vector.shape_cast %100 : vector<8x362xf32> to vector<1x8x362xf32>
    tpu.vector_store %arg5[%c0_43, %c0_44, %c0_45], %103 {strides = array<i32>} : memref<1x8x362xf32, #tpu.memory_space<vmem>>, vector<1x8x362xf32>,
    return
  }
  func.func @transform_0(%arg0: i32) -> (i32, i32, i32) {
    %c0_i32 = arith.constant 0 : i32
    %c0_i32_0 = arith.constant 0 : i32
    %c0_i32_1 = arith.constant 0 : i32
    return %arg0, %c0_i32, %c0_i32_0 : i32, i32, i32
  }
  func.func @transform_1(%arg0: i32) -> (i32, i32, i32) {
    %c0_i32 = arith.constant 0 : i32
    %c0_i32_0 = arith.constant 0 : i32
    %c0_i32_1 = arith.constant 0 : i32
    %c0_i32_2 = arith.constant 0 : i32
    return %c0_i32, %c0_i32_0, %c0_i32_1 : i32, i32, i32
  }
  func.func @transform_2(%arg0: i32) -> (i32, i32) {
    %c0_i32 = arith.constant 0 : i32
    %c0_i32_0 = arith.constant 0 : i32
    %c0_i32_1 = arith.constant 0 : i32
    return %c0_i32, %c0_i32_0 : i32, i32
  }
  func.func @transform_3(%arg0: i32) -> (i32, i32, i32) {
    %c0_i32 = arith.constant 0 : i32
    %c0_i32_0 = arith.constant 0 : i32
    %c0_i32_1 = arith.constant 0 : i32
    return %arg0, %c0_i32, %c0_i32_0 : i32, i32, i32
  }
  func.func @transform_4(%arg0: i32) -> (i32, i32, i32) {
    %c0_i32 = arith.constant 0 : i32
    %c0_i32_0 = arith.constant 0 : i32
    %c0_i32_1 = arith.constant 0 : i32
    return %arg0, %c0_i32, %c0_i32_0 : i32, i32, i32
  }
}

</mosaic_0001>

<llo_original>
// kernel: tpu_custom_call.1
$region0: #{tpu_custom_call.1}
  #allocation0 [shape = 'u32[]', space=smem, size = 0x4, offset = 0x4, fixed_abs, tag = 'smem constant byte address 0x4 - core index']
  #allocation1 [shape = 'u32[144,128]{1,0:T(1,128)}', space=vmem, size = 0x12000, scoped, tag = 'internal scratch']
  %s0 = inlined_call_operand.vmem [shape: bf16[2,3,400], index: 0, kind: input, shape index: {}]
  %s1 = inlined_call_operand.vmem [shape: bf16[9,8,3], index: 1, kind: input, shape index: {}]
  %s2 = inlined_call_operand.vmem [shape: f32[8,1], index: 2, kind: input, shape index: {}]
  %s3 = inlined_call_operand.hbm [shape: bf16[2,8,362], index: 3, kind: output, shape index: {0}]
  %s4 = inlined_call_operand.hbm [shape: f32[2,8,362], index: 4, kind: output, shape index: {1}]
  %5 = xla_tuple %s3, %s4
  %s6 = sld [smem:[#allocation0]]
  $region53: #{tpu_custom_call.1} parent=0
    _
  %s8 = ssub.s32 1, %s6
  %s9 = scalar_select 0, %s8, %s6
  $region1: #{tpu_custom_call.1} parent=0
    #allocation2 [shape = 'u8[12288]{0}', space=vmem, size = 0x3000, scoped, tag = 'output window, operand 0']
    #allocation3 [shape = 's32[2]{0}', space=sflag, size = 0x8, scoped, tag = 'scoped memory for tpu_custom_call.1']
    #allocation4 [shape = 'u8[24576]{0}', space=vmem, size = 0x6000, scoped, tag = 'output window, operand 1']
    #allocation5 [shape = 's32[2]{0}', space=sflag, size = 0x8, scoped, tag = 'scoped memory for tpu_custom_call.1']
    %10 = vsyncpa [#allocation3], 0
    %s11 = scalar_lea.sflag [#allocation3], 1
    %12 = vsyncpa %s11, 0
    %13 = vsyncpa [#allocation5], 0
    %s14 = scalar_lea.sflag [#allocation5], 1
    %15 = vsyncpa %s14, 0
    loop: start=0, step=1, limit=4
    $region2: #{tpu_custom_call.1} parent=1 // loop_pre_header
      _
    $region3: #{tpu_custom_call.1} parent=1 // loop_header
      %s17 = sphi 0, %s21
      %p18 = scmp.ge.s32.totalorder %s17, 4
      %s27 = sphi 0, %s29
      %s30 = sphi 0, %s27
      %s31 = sphi 0, %s30
      %s47 = sphi 0, %s31
      %s51 = sphi 0, %s51
      %s53 = sphi 0, %s51
      %s54 = sphi 0, %s53
      %s68 = sphi 0, %s54
      %s72 = sphi 0, %s72
      %s74 = sphi 0, %s72
      %s75 = sphi 0, %s74
      %s89 = sphi 0, %s75
      %s95 = sphi 0, %s97
      %s98 = sphi 0, %s95
      %s99 = sphi 0, %s98
      %s115 = sphi 0, %s99
      %s121 = sphi 0, %s123
      %s124 = sphi 0, %s121
      %s125 = sphi 0, %s124
      %s141 = sphi 0, %s125
    $region4: #{tpu_custom_call.1} parent=1 // loop_header_branch
      %20 = sbr.rel (%p18) target = $region8
    $region5: #{tpu_custom_call.1} parent=1 // loop_body
      %s22 = ssub.s32 %s17, 1
      %s23 = ssub.s32 %s17, 2
      %s24 = sadd.s32 %s17, 1
      %s25 = ssub.s32 %s17, %s24
      %p26 = scmp.eq.s32.totalorder %s25, 0
      %s28 = sadd.s32 %s27, 1
      %s29 = scalar_select %p26, %s27, %s28
      %p32 = pneg %p26
      %p33 = scmp.eq.s32.totalorder %s17, 1
      %p34 = por %p32, %p33
      %p35 = scmp.ne.s32.totalorder %s27, %s30
      %p36 = scmp.eq.s32.totalorder %s17, 0
      %p37 = por %p35, %p36
      %p38 = scmp.ne.s32.totalorder %s27, %s30
      %p39 = scmp.eq.s32.totalorder %s22, 1
      %p40 = por %p38, %p39
      %p41 = scmp.ne.s32.totalorder %s30, %s31
      %p42 = scmp.eq.s32.totalorder %s22, 0
      %p43 = por %p41, %p42
      %p44 = scmp.ne.s32.totalorder %s30, %s31
      %p45 = scmp.eq.s32.totalorder %s23, 1
      %p46 = por %p44, %p45
      %p48 = scmp.ne.s32.totalorder %s31, %s47
      %p49 = scmp.eq.s32.totalorder %s23, 0
      %p50 = por %p48, %p49
      %s52 = sadd.s32 %s51, 1
      %p55 = scmp.eq.s32.totalorder %s17, 1
      %p56 = scmp.ne.s32.totalorder %s51, %s53
      %p57 = scmp.eq.s32.totalorder %s17, 0
      %p58 = por %p56, %p57
      %p59 = scmp.ne.s32.totalorder %s51, %s53
      %p60 = scmp.eq.s32.totalorder %s22, 1
      %p61 = por %p59, %p60
      %p62 = scmp.ne.s32.totalorder %s53, %s54
      %p63 = scmp.eq.s32.totalorder %s22, 0
      %p64 = por %p62, %p63
      %p65 = scmp.ne.s32.totalorder %s53, %s54
      %p66 = scmp.eq.s32.totalorder %s23, 1
      %p67 = por %p65, %p66
      %p69 = scmp.ne.s32.totalorder %s54, %s68
      %p70 = scmp.eq.s32.totalorder %s23, 0
      %p71 = por %p69, %p70
      %s73 = sadd.s32 %s72, 1
      %p76 = scmp.eq.s32.totalorder %s17, 1
      %p77 = scmp.ne.s32.totalorder %s72, %s74
      %p78 = scmp.eq.s32.totalorder %s17, 0
      %p79 = por %p77, %p78
      %p80 = scmp.ne.s32.totalorder %s72, %s74
      %p81 = scmp.eq.s32.totalorder %s22, 1
      %p82 = por %p80, %p81
      %p83 = scmp.ne.s32.totalorder %s74, %s75
      %p84 = scmp.eq.s32.totalorder %s22, 0
      %p85 = por %p83, %p84
      %p86 = scmp.ne.s32.totalorder %s74, %s75
      %p87 = scmp.eq.s32.totalorder %s23, 1
      %p88 = por %p86, %p87
      %p90 = scmp.ne.s32.totalorder %s75, %s89
      %p91 = scmp.eq.s32.totalorder %s23, 0
      %p92 = por %p90, %p91
      %s93 = ssub.s32 %s17, %s24
      %p94 = scmp.eq.s32.totalorder %s93, 0
      %s96 = sadd.s32 %s95, 1
      %s97 = scalar_select %p94, %s95, %s96
      %p100 = pneg %p94
      %p101 = scmp.eq.s32.totalorder %s17, 1
      %p102 = por %p100, %p101
      %p103 = scmp.ne.s32.totalorder %s95, %s98
      %p104 = scmp.eq.s32.totalorder %s17, 0
      %p105 = por %p103, %p104
      %p106 = scmp.ne.s32.totalorder %s95, %s98
      %p107 = scmp.eq.s32.totalorder %s22, 1
      %p108 = por %p106, %p107
      %p109 = scmp.ne.s32.totalorder %s98, %s99
      %p110 = scmp.eq.s32.totalorder %s22, 0
      %p111 = por %p109, %p110
      %p112 = scmp.ne.s32.totalorder %s98, %s99
      %p113 = scmp.eq.s32.totalorder %s23, 1
      %p114 = por %p112, %p113
      %p116 = scmp.ne.s32.totalorder %s99, %s115
      %p117 = scmp.eq.s32.totalorder %s23, 0
      %p118 = por %p116, %p117
      %s119 = ssub.s32 %s17, %s24
      %p120 = scmp.eq.s32.totalorder %s119, 0
      %s122 = sadd.s32 %s121, 1
      %s123 = scalar_select %p120, %s121, %s122
      %p126 = pneg %p120
      %p127 = scmp.eq.s32.totalorder %s17, 1
      %p128 = por %p126, %p127
      %p129 = scmp.ne.s32.totalorder %s121, %s124
      %p130 = scmp.eq.s32.totalorder %s17, 0
      %p131 = por %p129, %p130
      %p132 = scmp.ne.s32.totalorder %s121, %s124
      %p133 = scmp.eq.s32.totalorder %s22, 1
      %p134 = por %p132, %p133
      %p135 = scmp.ne.s32.totalorder %s124, %s125
      %p136 = scmp.eq.s32.totalorder %s22, 0
      %p137 = por %p135, %p136
      %p138 = scmp.ne.s32.totalorder %s124, %s125
      %p139 = scmp.eq.s32.totalorder %s23, 1
      %p140 = por %p138, %p139
      %p142 = scmp.ne.s32.totalorder %s125, %s141
      %p143 = scmp.eq.s32.totalorder %s23, 0
      %p144 = por %p142, %p143
      %p145 = scmp.le.s32.totalorder 1, %s17
      %p146 = scmp.lt.s32.totalorder %s17, 3
      %p147 = pnand %p145, %p146
      %p148 = pneg %p147
      // Predicated region
      $region9: #{tpu_custom_call.1} parent=5 // pred_check
        _
      $region10: #{tpu_custom_call.1} parent=5 // pred_check_branch
        %150 = sbr.rel (%p147) target = $region12
      $region11: #{tpu_custom_call.1} parent=5 // pred_region
        %s151 = ssub.s32 %s17, 1
        // Predicated region
        $region13: #{tpu_custom_call.1} parent=11 // pred_check
          %p152 = pneg %p64
        $region14: #{tpu_custom_call.1} parent=11 // pred_check_branch
          %154 = sbr.rel (%p152) target = $region16
        $region15: #{tpu_custom_call.1} parent=11 // pred_region
          _
        $region16: #{tpu_custom_call.1} parent=11 // pred_fallthru
          _
        // Predicated region
        $region17: #{tpu_custom_call.1} parent=11 // pred_check
          %p155 = pneg %p85
        $region18: #{tpu_custom_call.1} parent=11 // pred_check_branch
          %157 = sbr.rel (%p155) target = $region20
        $region19: #{tpu_custom_call.1} parent=11 // pred_region
          _
        $region20: #{tpu_custom_call.1} parent=11 // pred_fallthru
          _
      $region12: #{tpu_custom_call.1} parent=5 // pred_fallthru
        _
      %p158 = scmp.lt.s32.totalorder %s17, 2
      // Predicated region
      $region21: #{tpu_custom_call.1} parent=5 // pred_check
        %p159 = pneg %p158
      $region22: #{tpu_custom_call.1} parent=5 // pred_check_branch
        %161 = sbr.rel (%p159) target = $region24
      $region23: #{tpu_custom_call.1} parent=5 // pred_region
        // Predicated region
        $region25: #{tpu_custom_call.1} parent=23 // pred_check
          %p162 = pneg %p37
        $region26: #{tpu_custom_call.1} parent=23 // pred_check_branch
          %164 = sbr.rel (%p162) target = $region28
        $region27: #{tpu_custom_call.1} parent=23 // pred_region
          %p165 = scmp.lt.s32.totalorder %s17, 1
          %s166 = scalar_select %p165, %s17, 1
          %s167 = smul.addr %s166, 4
          %s168 = smul.addr %s167, 2
          %s169 = scalar_lea.vmem %s0, %s168
        $region28: #{tpu_custom_call.1} parent=23 // pred_fallthru
          _
      $region24: #{tpu_custom_call.1} parent=5 // pred_fallthru
        _
      %p170 = scmp.le.s32.totalorder 1, %s17
      %p171 = scmp.lt.s32.totalorder %s17, 3
      %p172 = pnand %p170, %p171
      %p173 = pneg %p172
      // Predicated region
      $region29: #{tpu_custom_call.1} parent=5 // pred_check
        _
      $region30: #{tpu_custom_call.1} parent=5 // pred_check_branch
        %175 = sbr.rel (%p172) target = $region32
      $region31: #{tpu_custom_call.1} parent=5 // pred_region
        %s176 = ssub.s32 %s17, 1
        %p177 = scmp.lt.s32.totalorder %s22, 1
        %s178 = scalar_select %p177, %s22, 1
        %s179 = smul.addr %s178, 4
        %s180 = smul.addr %s179, 2
        %s181 = scalar_lea.vmem %s0, %s180
        %p182 = pneg %p43
        %p183 = pneg %p40
        %p184 = pneg %p64
        %p185 = pneg %p61
        %p186 = pneg %p85
        %p187 = pneg %p82
        %p188 = pneg %p111
        %p189 = pneg %p108
        %s190 = sand.u32 %s98, 1
        %s191 = scalar_lea.sflag [#allocation3], %s190
        %s192 = sand.u32 %s98, 1
        %s193 = smul.addr %s192, 12
        %s194 = scalar_lea.vmem [#allocation2], %s193
        %p195 = pneg %p137
        %p196 = pneg %p134
        %s197 = sand.u32 %s124, 1
        %s198 = scalar_lea.sflag [#allocation5], %s197
        %s199 = sand.u32 %s124, 1
        %s200 = smul.addr %s199, 24
        %s201 = scalar_lea.vmem [#allocation4], %s200
        %p202 = scmp.lt.s32.totalorder %s22, 1
        %s203 = scalar_select %p202, %s22, 1
        %s204 = smul.addr %s203, 4
        %s205 = smul.addr %s204, 2
        %s206 = scalar_lea.vmem %s0, %s205
        %v208 = vld [vmem:[%s206] sm:$0xff]
        %v209 = vld [vmem:[%s1] sm:$0xf]
        %s210 = scalar_lea.vmem %s1, 4
        %v211 = vld [vmem:[%s210] sm:$0xf]
        %v213 = vcombine.high %v208, %v208
        %v215 = vunpack.c.l.s4 1983009808
        %v216 = vunpack.c.0.s8 %v215
        %v217 = vlaneseq
        %v218 = vshrl.u32 %v217, 7
        %v219 = vsub.s32 %v216, %v218
        %v220 = vrot.slane %v208, %v219
        %v222 = vunpack.c.l.s4 1983009808
        %v223 = vunpack.c.0.s8 %v222
        %v224 = vlaneseq
        %v225 = vshrl.u32 %v224, 7
        %v226 = vsub.s32 %v223, %v225
        %v227 = vrot.slane %v213, %v226
        %v228 = vcombine.high %v220, %v220
        %229 = vrot.lane.b32.xlu0 %v220, 127
        %v230 = vpop.permute.xlu0 %229
        %231 = vrot.lane.b32.xlu0 %v228, 127
        %v232 = vpop.permute.xlu0 %231
        %233 = vrot.lane.b32.xlu0 %v227, 127
        %v234 = vpop.permute.xlu0 %233
        %vm235 = vcmask 1039360
        %v236 = vsel %vm235, %v230, %v232
        %v237 = vsel %vm235, %v232, %v234
        %vm238 = vcmask 23552
        %v240 = vsel %vm238, %v211, 0
        %vm242 = vcmask 1040384
        %vm243 = vcmask 1041408
        %v244 = vsel %vm242, 4294967295, 65535
        %v245 = vsel %vm243, %v244, 0
        %v247 = vand.u32 %v236, %v245
        %v250 = vand.u32 %v237, %v245
        %v253 = vand.u32 %v234, %v245
        %255 = vmatprep.subr.bf16.mxu0 0
        %256 = vmatpush1.bf16.msra.mxu0 0
        %257 = vmatprep.subr.bf16.mxu0 0
        %258 = vmatpush1.bf16.msra.mxu0 0
        %259 = vmatprep.subr.bf16.mxu0 0
        %260 = vmatpush1.bf16.msra.mxu0 0
        %261 = vmatprep.subr.bf16.mxu0 0
        %262 = vmatpush1.bf16.msra.mxu0 0
        %263 = vmatprep.subr.bf16.mxu0 0
        %264 = vmatpush1.bf16.msra.mxu0 0
        %265 = vmatprep.subr.bf16.mxu0 0
        %266 = vmatpush1.bf16.msra.mxu0 0
        %267 = vmatprep.subr.bf16.mxu0 0
        %268 = vmatpush1.bf16.msra.mxu0 0
        %269 = vmatprep.subr.bf16.mxu0 %v250
        %270 = vmatpush1.bf16.msra.mxu0 %v247
        %271 = vmatprep.subr.bf16.mxu0 0
        %272 = vmatpush2.bf16.msra.mxu0 0
        %273 = vmatprep.subr.bf16.mxu0 0
        %274 = vmatpush2.bf16.msra.mxu0 0
        %275 = vmatprep.subr.bf16.mxu0 0
        %276 = vmatpush2.bf16.msra.mxu0 0
        %277 = vmatprep.subr.bf16.mxu0 0
        %278 = vmatpush2.bf16.msra.mxu0 0
        %279 = vmatprep.subr.bf16.mxu0 0
        %280 = vmatpush2.bf16.msra.mxu0 0
        %281 = vmatprep.subr.bf16.mxu0 0
        %282 = vmatpush2.bf16.msra.mxu0 0
        %283 = vmatprep.subr.bf16.mxu0 0
        %284 = vmatpush2.bf16.msra.mxu0 0
        %285 = vmatprep.subr.bf16.mxu0 0
        %286 = vmatpush2.bf16.msra.mxu0 0
        %287 = vmatprep.mubr.bf16.mxu0 0
        %288 = vmatmul.mubr.bf16.gmra.mxu0 %v240
        %v289 = vpop.f32.mrf.mxu0
        %v290 = vadd.f32 0.0, %v289
        %v291 = vpop.f32.mrf.mxu0
        %v292 = vadd.f32 0.0, %v291
        %v293 = vpop.f32.mrf.mxu0
        %v294 = vpop.f32.mrf.mxu0
        %295 = vdwg.mxu0
        %296 = vmatprep.subr.bf16.mxu0 0
        %297 = vmatpush1.bf16.msra.mxu0 0
        %298 = vmatprep.subr.bf16.mxu0 0
        %299 = vmatpush1.bf16.msra.mxu0 0
        %300 = vmatprep.subr.bf16.mxu0 0
        %301 = vmatpush1.bf16.msra.mxu0 0
        %302 = vmatprep.subr.bf16.mxu0 0
        %303 = vmatpush1.bf16.msra.mxu0 0
        %304 = vmatprep.subr.bf16.mxu0 0
        %305 = vmatpush1.bf16.msra.mxu0 0
        %306 = vmatprep.subr.bf16.mxu0 0
        %307 = vmatpush1.bf16.msra.mxu0 0
        %308 = vmatprep.subr.bf16.mxu0 0
        %309 = vmatpush1.bf16.msra.mxu0 0
        %310 = vmatprep.subr.bf16.mxu0 0
        %311 = vmatpush1.bf16.msra.mxu0 %v253
        %312 = vmatprep.subr.bf16.mxu0 0
        %313 = vmatpush2.bf16.msra.mxu0 0
        %314 = vmatprep.subr.bf16.mxu0 0
        %315 = vmatpush2.bf16.msra.mxu0 0
        %316 = vmatprep.subr.bf16.mxu0 0
        %317 = vmatpush2.bf16.msra.mxu0 0
        %318 = vmatprep.subr.bf16.mxu0 0
        %319 = vmatpush2.bf16.msra.mxu0 0
        %320 = vmatprep.subr.bf16.mxu0 0
        %321 = vmatpush2.bf16.msra.mxu0 0
        %322 = vmatprep.subr.bf16.mxu0 0
        %323 = vmatpush2.bf16.msra.mxu0 0
        %324 = vmatprep.subr.bf16.mxu0 0
        %325 = vmatpush2.bf16.msra.mxu0 0
        %326 = vmatprep.subr.bf16.mxu0 0
        %327 = vmatpush2.bf16.msra.mxu0 0
        %328 = vmatprep.mubr.bf16.mxu0 0
        %329 = vmatmul.mubr.bf16.gmra.mxu0 %v240
        %v330 = vpop.f32.mrf.mxu0
        %v331 = vadd.f32 0.0, %v330
        %v332 = vpop.f32.mrf.mxu0
        %v333 = vpop.f32.mrf.mxu0
        %v334 = vpop.f32.mrf.mxu0
        %335 = vdwg.mxu0
        %v337 = vsel %vm238, %v209, 0
        %v340 = vand.u32 %v220, %v245
        %v343 = vand.u32 %v228, %v245
        %v346 = vand.u32 %v227, %v245
        %348 = vmatprep.subr.bf16.mxu0 0
        %349 = vmatpush1.bf16.msra.mxu0 0
        %350 = vmatprep.subr.bf16.mxu0 0
        %351 = vmatpush1.bf16.msra.mxu0 0
        %352 = vmatprep.subr.bf16.mxu0 0
        %353 = vmatpush1.bf16.msra.mxu0 0
        %354 = vmatprep.subr.bf16.mxu0 0
        %355 = vmatpush1.bf16.msra.mxu0 0
        %356 = vmatprep.subr.bf16.mxu0 0
        %357 = vmatpush1.bf16.msra.mxu0 0
        %358 = vmatprep.subr.bf16.mxu0 0
        %359 = vmatpush1.bf16.msra.mxu0 0
        %360 = vmatprep.subr.bf16.mxu0 0
        %361 = vmatpush1.bf16.msra.mxu0 0
        %362 = vmatprep.subr.bf16.mxu0 %v343
        %363 = vmatpush1.bf16.msra.mxu0 %v340
        %364 = vmatprep.subr.bf16.mxu0 0
        %365 = vmatpush2.bf16.msra.mxu0 0
        %366 = vmatprep.subr.bf16.mxu0 0
        %367 = vmatpush2.bf16.msra.mxu0 0
        %368 = vmatprep.subr.bf16.mxu0 0
        %369 = vmatpush2.bf16.msra.mxu0 0
        %370 = vmatprep.subr.bf16.mxu0 0
        %371 = vmatpush2.bf16.msra.mxu0 0
        %372 = vmatprep.subr.bf16.mxu0 0
        %373 = vmatpush2.bf16.msra.mxu0 0
        %374 = vmatprep.subr.bf16.mxu0 0
        %375 = vmatpush2.bf16.msra.mxu0 0
        %376 = vmatprep.subr.bf16.mxu0 0
        %377 = vmatpush2.bf16.msra.mxu0 0
        %378 = vmatprep.subr.bf16.mxu0 0
        %379 = vmatpush2.bf16.msra.mxu0 0
        %380 = vmatprep.mubr.bf16.mxu0 0
        %381 = vmatmul.mubr.bf16.gmra.mxu0 %v337
        %v382 = vpop.f32.mrf.mxu0
        %v383 = vadd.f32 %v290, %v382
        %v384 = vpop.f32.mrf.mxu0
        %v385 = vadd.f32 %v292, %v384
        %v386 = vpop.f32.mrf.mxu0
        %v387 = vpop.f32.mrf.mxu0
        %388 = vdwg.mxu0
        %389 = vmatprep.subr.bf16.mxu0 0
        %390 = vmatpush1.bf16.msra.mxu0 0
        %391 = vmatprep.subr.bf16.mxu0 0
        %392 = vmatpush1.bf16.msra.mxu0 0
        %393 = vmatprep.subr.bf16.mxu0 0
        %394 = vmatpush1.bf16.msra.mxu0 0
        %395 = vmatprep.subr.bf16.mxu0 0
        %396 = vmatpush1.bf16.msra.mxu0 0
        %397 = vmatprep.subr.bf16.mxu0 0
        %398 = vmatpush1.bf16.msra.mxu0 0
        %399 = vmatprep.subr.bf16.mxu0 0
        %400 = vmatpush1.bf16.msra.mxu0 0
        %401 = vmatprep.subr.bf16.mxu0 0
        %402 = vmatpush1.bf16.msra.mxu0 0
        %403 = vmatprep.subr.bf16.mxu0 0
        %404 = vmatpush1.bf16.msra.mxu0 %v346
        %405 = vmatprep.subr.bf16.mxu0 0
        %406 = vmatpush2.bf16.msra.mxu0 0
        %407 = vmatprep.subr.bf16.mxu0 0
        %408 = vmatpush2.bf16.msra.mxu0 0
        %409 = vmatprep.subr.bf16.mxu0 0
        %410 = vmatpush2.bf16.msra.mxu0 0
        %411 = vmatprep.subr.bf16.mxu0 0
        %412 = vmatpush2.bf16.msra.mxu0 0
        %413 = vmatprep.subr.bf16.mxu0 0
        %414 = vmatpush2.bf16.msra.mxu0 0
        %415 = vmatprep.subr.bf16.mxu0 0
        %416 = vmatpush2.bf16.msra.mxu0 0
        %417 = vmatprep.subr.bf16.mxu0 0
        %418 = vmatpush2.bf16.msra.mxu0 0
        %419 = vmatprep.subr.bf16.mxu0 0
        %420 = vmatpush2.bf16.msra.mxu0 0
        %421 = vmatprep.mubr.bf16.mxu0 0
        %422 = vmatmul.mubr.bf16.gmra.mxu0 %v337
        %v423 = vpop.f32.mrf.mxu0
        %v424 = vadd.f32 %v331, %v423
        %v425 = vpop.f32.mrf.mxu0
        %v426 = vpop.f32.mrf.mxu0
        %v427 = vpop.f32.mrf.mxu0
        %428 = vdwg.mxu0
        %s429 = scalar_lea.vmem %s1, 8
        %v430 = vld [vmem:[%s429] sm:$0xf]
        %431 = vrot.lane.b32.xlu0 %v220, 126
        %v432 = vpop.permute.xlu0 %431
        %433 = vrot.lane.b32.xlu0 %v228, 126
        %v434 = vpop.permute.xlu0 %433
        %435 = vrot.lane.b32.xlu0 %v227, 126
        %v436 = vpop.permute.xlu0 %435
        %vm437 = vcmask 1031168
        %v438 = vsel %vm437, %v432, %v434
        %v439 = vsel %vm437, %v434, %v436
        %v441 = vsel %vm238, %v430, 0
        %v444 = vand.u32 %v438, %v245
        %v447 = vand.u32 %v439, %v245
        %v450 = vand.u32 %v436, %v245
        %452 = vmatprep.subr.bf16.mxu0 0
        %453 = vmatpush1.bf16.msra.mxu0 0
        %454 = vmatprep.subr.bf16.mxu0 0
        %455 = vmatpush1.bf16.msra.mxu0 0
        %456 = vmatprep.subr.bf16.mxu0 0
        %457 = vmatpush1.bf16.msra.mxu0 0
        %458 = vmatprep.subr.bf16.mxu0 0
        %459 = vmatpush1.bf16.msra.mxu0 0
        %460 = vmatprep.subr.bf16.mxu0 0
        %461 = vmatpush1.bf16.msra.mxu0 0
        %462 = vmatprep.subr.bf16.mxu0 0
        %463 = vmatpush1.bf16.msra.mxu0 0
        %464 = vmatprep.subr.bf16.mxu0 0
        %465 = vmatpush1.bf16.msra.mxu0 0
        %466 = vmatprep.subr.bf16.mxu0 %v447
        %467 = vmatpush1.bf16.msra.mxu0 %v444
        %468 = vmatprep.subr.bf16.mxu0 0
        %469 = vmatpush2.bf16.msra.mxu0 0
        %470 = vmatprep.subr.bf16.mxu0 0
        %471 = vmatpush2.bf16.msra.mxu0 0
        %472 = vmatprep.subr.bf16.mxu0 0
        %473 = vmatpush2.bf16.msra.mxu0 0
        %474 = vmatprep.subr.bf16.mxu0 0
        %475 = vmatpush2.bf16.msra.mxu0 0
        %476 = vmatprep.subr.bf16.mxu0 0
        %477 = vmatpush2.bf16.msra.mxu0 0
        %478 = vmatprep.subr.bf16.mxu0 0
        %479 = vmatpush2.bf16.msra.mxu0 0
        %480 = vmatprep.subr.bf16.mxu0 0
        %481 = vmatpush2.bf16.msra.mxu0 0
        %482 = vmatprep.subr.bf16.mxu0 0
        %483 = vmatpush2.bf16.msra.mxu0 0
        %484 = vmatprep.mubr.bf16.mxu0 0
        %485 = vmatmul.mubr.bf16.gmra.mxu0 %v441
        %v486 = vpop.f32.mrf.mxu0
        %v487 = vadd.f32 0.0, %v486
        %v488 = vpop.f32.mrf.mxu0
        %v489 = vadd.f32 0.0, %v488
        %v490 = vpop.f32.mrf.mxu0
        %v491 = vpop.f32.mrf.mxu0
        %492 = vdwg.mxu0
        %493 = vmatprep.subr.bf16.mxu0 0
        %494 = vmatpush1.bf16.msra.mxu0 0
        %495 = vmatprep.subr.bf16.mxu0 0
        %496 = vmatpush1.bf16.msra.mxu0 0
        %497 = vmatprep.subr.bf16.mxu0 0
        %498 = vmatpush1.bf16.msra.mxu0 0
        %499 = vmatprep.subr.bf16.mxu0 0
        %500 = vmatpush1.bf16.msra.mxu0 0
        %501 = vmatprep.subr.bf16.mxu0 0
        %502 = vmatpush1.bf16.msra.mxu0 0
        %503 = vmatprep.subr.bf16.mxu0 0
        %504 = vmatpush1.bf16.msra.mxu0 0
        %505 = vmatprep.subr.bf16.mxu0 0
        %506 = vmatpush1.bf16.msra.mxu0 0
        %507 = vmatprep.subr.bf16.mxu0 0
        %508 = vmatpush1.bf16.msra.mxu0 %v450
        %509 = vmatprep.subr.bf16.mxu0 0
        %510 = vmatpush2.bf16.msra.mxu0 0
        %511 = vmatprep.subr.bf16.mxu0 0
        %512 = vmatpush2.bf16.msra.mxu0 0
        %513 = vmatprep.subr.bf16.mxu0 0
        %514 = vmatpush2.bf16.msra.mxu0 0
        %515 = vmatprep.subr.bf16.mxu0 0
        %516 = vmatpush2.bf16.msra.mxu0 0
        %517 = vmatprep.subr.bf16.mxu0 0
        %518 = vmatpush2.bf16.msra.mxu0 0
        %519 = vmatprep.subr.bf16.mxu0 0
        %520 = vmatpush2.bf16.msra.mxu0 0
        %521 = vmatprep.subr.bf16.mxu0 0
        %522 = vmatpush2.bf16.msra.mxu0 0
        %523 = vmatprep.subr.bf16.mxu0 0
        %524 = vmatpush2.bf16.msra.mxu0 0
        %525 = vmatprep.mubr.bf16.mxu0 0
        %526 = vmatmul.mubr.bf16.gmra.mxu0 %v441
        %v527 = vpop.f32.mrf.mxu0
        %v528 = vadd.f32 0.0, %v527
        %v529 = vpop.f32.mrf.mxu0
        %v530 = vpop.f32.mrf.mxu0
        %v531 = vpop.f32.mrf.mxu0
        %532 = vdwg.mxu0
        %v533 = vadd.f32 %v383, %v487
        %v534 = vadd.f32 %v385, %v489
        %v535 = vadd.f32 %v424, %v528
        %s536 = scalar_lea.vmem %s1, 12
        %v537 = vld [vmem:[%s536] sm:$0xf]
        %538 = vrot.lane.b32.xlu0 %v220, 110
        %v539 = vpop.permute.xlu0 %538
        %540 = vrot.lane.b32.xlu0 %v228, 110
        %v541 = vpop.permute.xlu0 %540
        %542 = vrot.lane.b32.xlu0 %v227, 110
        %v543 = vpop.permute.xlu0 %542
        %vm544 = vcmask 900096
        %v545 = vsel %vm544, %v539, %v541
        %v546 = vsel %vm544, %v541, %v543
        %v548 = vsel %vm238, %v537, 0
        %v551 = vand.u32 %v545, %v245
        %v554 = vand.u32 %v546, %v245
        %v557 = vand.u32 %v543, %v245
        %559 = vmatprep.subr.bf16.mxu0 0
        %560 = vmatpush1.bf16.msra.mxu0 0
        %561 = vmatprep.subr.bf16.mxu0 0
        %562 = vmatpush1.bf16.msra.mxu0 0
        %563 = vmatprep.subr.bf16.mxu0 0
        %564 = vmatpush1.bf16.msra.mxu0 0
        %565 = vmatprep.subr.bf16.mxu0 0
        %566 = vmatpush1.bf16.msra.mxu0 0
        %567 = vmatprep.subr.bf16.mxu0 0
        %568 = vmatpush1.bf16.msra.mxu0 0
        %569 = vmatprep.subr.bf16.mxu0 0
        %570 = vmatpush1.bf16.msra.mxu0 0
        %571 = vmatprep.subr.bf16.mxu0 0
        %572 = vmatpush1.bf16.msra.mxu0 0
        %573 = vmatprep.subr.bf16.mxu0 %v554
        %574 = vmatpush1.bf16.msra.mxu0 %v551
        %575 = vmatprep.subr.bf16.mxu0 0
        %576 = vmatpush2.bf16.msra.mxu0 0
        %577 = vmatprep.subr.bf16.mxu0 0
        %578 = vmatpush2.bf16.msra.mxu0 0
        %579 = vmatprep.subr.bf16.mxu0 0
        %580 = vmatpush2.bf16.msra.mxu0 0
        %581 = vmatprep.subr.bf16.mxu0 0
        %582 = vmatpush2.bf16.msra.mxu0 0
        %583 = vmatprep.subr.bf16.mxu0 0
        %584 = vmatpush2.bf16.msra.mxu0 0
        %585 = vmatprep.subr.bf16.mxu0 0
        %586 = vmatpush2.bf16.msra.mxu0 0
        %587 = vmatprep.subr.bf16.mxu0 0
        %588 = vmatpush2.bf16.msra.mxu0 0
        %589 = vmatprep.subr.bf16.mxu0 0
        %590 = vmatpush2.bf16.msra.mxu0 0
        %591 = vmatprep.mubr.bf16.mxu0 0
        %592 = vmatmul.mubr.bf16.gmra.mxu0 %v548
        %v593 = vpop.f32.mrf.mxu0
        %v594 = vadd.f32 0.0, %v593
        %v595 = vpop.f32.mrf.mxu0
        %v596 = vadd.f32 0.0, %v595
        %v597 = vpop.f32.mrf.mxu0
        %v598 = vpop.f32.mrf.mxu0
        %599 = vdwg.mxu0
        %600 = vmatprep.subr.bf16.mxu0 0
        %601 = vmatpush1.bf16.msra.mxu0 0
        %602 = vmatprep.subr.bf16.mxu0 0
        %603 = vmatpush1.bf16.msra.mxu0 0
        %604 = vmatprep.subr.bf16.mxu0 0
        %605 = vmatpush1.bf16.msra.mxu0 0
        %606 = vmatprep.subr.bf16.mxu0 0
        %607 = vmatpush1.bf16.msra.mxu0 0
        %608 = vmatprep.subr.bf16.mxu0 0
        %609 = vmatpush1.bf16.msra.mxu0 0
        %610 = vmatprep.subr.bf16.mxu0 0
        %611 = vmatpush1.bf16.msra.mxu0 0
        %612 = vmatprep.subr.bf16.mxu0 0
        %613 = vmatpush1.bf16.msra.mxu0 0
        %614 = vmatprep.subr.bf16.mxu0 0
        %615 = vmatpush1.bf16.msra.mxu0 %v557
        %616 = vmatprep.subr.bf16.mxu0 0
        %617 = vmatpush2.bf16.msra.mxu0 0
        %618 = vmatprep.subr.bf16.mxu0 0
        %619 = vmatpush2.bf16.msra.mxu0 0
        %620 = vmatprep.subr.bf16.mxu0 0
        %621 = vmatpush2.bf16.msra.mxu0 0
        %622 = vmatprep.subr.bf16.mxu0 0
        %623 = vmatpush2.bf16.msra.mxu0 0
        %624 = vmatprep.subr.bf16.mxu0 0
        %625 = vmatpush2.bf16.msra.mxu0 0
        %626 = vmatprep.subr.bf16.mxu0 0
        %627 = vmatpush2.bf16.msra.mxu0 0
        %628 = vmatprep.subr.bf16.mxu0 0
        %629 = vmatpush2.bf16.msra.mxu0 0
        %630 = vmatprep.subr.bf16.mxu0 0
        %631 = vmatpush2.bf16.msra.mxu0 0
        %632 = vmatprep.mubr.bf16.mxu0 0
        %633 = vmatmul.mubr.bf16.gmra.mxu0 %v548
        %v634 = vpop.f32.mrf.mxu0
        %v635 = vadd.f32 0.0, %v634
        %v636 = vpop.f32.mrf.mxu0
        %v637 = vpop.f32.mrf.mxu0
        %v638 = vpop.f32.mrf.mxu0
        %639 = vdwg.mxu0
        %v640 = vadd.f32 %v533, %v594
        %v641 = vadd.f32 %v534, %v596
        %v642 = vadd.f32 %v535, %v635
        %s643 = scalar_lea.vmem %s1, 16
        %v644 = vld [vmem:[%s643] sm:$0xf]
        %645 = vrot.lane.b32.xlu0 %v220, 109
        %v646 = vpop.permute.xlu0 %645
        %647 = vrot.lane.b32.xlu0 %v228, 109
        %v648 = vpop.permute.xlu0 %647
        %649 = vrot.lane.b32.xlu0 %v227, 109
        %v650 = vpop.permute.xlu0 %649
        %vm651 = vcmask 891904
        %v652 = vsel %vm651, %v646, %v648
        %v653 = vsel %vm651, %v648, %v650
        %v655 = vsel %vm238, %v644, 0
        %v658 = vand.u32 %v652, %v245
        %v661 = vand.u32 %v653, %v245
        %v664 = vand.u32 %v650, %v245
        %666 = vmatprep.subr.bf16.mxu0 0
        %667 = vmatpush1.bf16.msra.mxu0 0
        %668 = vmatprep.subr.bf16.mxu0 0
        %669 = vmatpush1.bf16.msra.mxu0 0
        %670 = vmatprep.subr.bf16.mxu0 0
        %671 = vmatpush1.bf16.msra.mxu0 0
        %672 = vmatprep.subr.bf16.mxu0 0
        %673 = vmatpush1.bf16.msra.mxu0 0
        %674 = vmatprep.subr.bf16.mxu0 0
        %675 = vmatpush1.bf16.msra.mxu0 0
        %676 = vmatprep.subr.bf16.mxu0 0
        %677 = vmatpush1.bf16.msra.mxu0 0
        %678 = vmatprep.subr.bf16.mxu0 0
        %679 = vmatpush1.bf16.msra.mxu0 0
        %680 = vmatprep.subr.bf16.mxu0 %v661
        %681 = vmatpush1.bf16.msra.mxu0 %v658
        %682 = vmatprep.subr.bf16.mxu0 0
        %683 = vmatpush2.bf16.msra.mxu0 0
        %684 = vmatprep.subr.bf16.mxu0 0
        %685 = vmatpush2.bf16.msra.mxu0 0
        %686 = vmatprep.subr.bf16.mxu0 0
        %687 = vmatpush2.bf16.msra.mxu0 0
        %688 = vmatprep.subr.bf16.mxu0 0
        %689 = vmatpush2.bf16.msra.mxu0 0
        %690 = vmatprep.subr.bf16.mxu0 0
        %691 = vmatpush2.bf16.msra.mxu0 0
        %692 = vmatprep.subr.bf16.mxu0 0
        %693 = vmatpush2.bf16.msra.mxu0 0
        %694 = vmatprep.subr.bf16.mxu0 0
        %695 = vmatpush2.bf16.msra.mxu0 0
        %696 = vmatprep.subr.bf16.mxu0 0
        %697 = vmatpush2.bf16.msra.mxu0 0
        %698 = vmatprep.mubr.bf16.mxu0 0
        %699 = vmatmul.mubr.bf16.gmra.mxu0 %v655
        %v700 = vpop.f32.mrf.mxu0
        %v701 = vadd.f32 0.0, %v700
        %v702 = vpop.f32.mrf.mxu0
        %v703 = vadd.f32 0.0, %v702
        %v704 = vpop.f32.mrf.mxu0
        %v705 = vpop.f32.mrf.mxu0
        %706 = vdwg.mxu0
        %707 = vmatprep.subr.bf16.mxu0 0
        %708 = vmatpush1.bf16.msra.mxu0 0
        %709 = vmatprep.subr.bf16.mxu0 0
        %710 = vmatpush1.bf16.msra.mxu0 0
        %711 = vmatprep.subr.bf16.mxu0 0
        %712 = vmatpush1.bf16.msra.mxu0 0
        %713 = vmatprep.subr.bf16.mxu0 0
        %714 = vmatpush1.bf16.msra.mxu0 0
        %715 = vmatprep.subr.bf16.mxu0 0
        %716 = vmatpush1.bf16.msra.mxu0 0
        %717 = vmatprep.subr.bf16.mxu0 0
        %718 = vmatpush1.bf16.msra.mxu0 0
        %719 = vmatprep.subr.bf16.mxu0 0
        %720 = vmatpush1.bf16.msra.mxu0 0
        %721 = vmatprep.subr.bf16.mxu0 0
        %722 = vmatpush1.bf16.msra.mxu0 %v664
        %723 = vmatprep.subr.bf16.mxu0 0
        %724 = vmatpush2.bf16.msra.mxu0 0
        %725 = vmatprep.subr.bf16.mxu0 0
        %726 = vmatpush2.bf16.msra.mxu0 0
        %727 = vmatprep.subr.bf16.mxu0 0
        %728 = vmatpush2.bf16.msra.mxu0 0
        %729 = vmatprep.subr.bf16.mxu0 0
        %730 = vmatpush2.bf16.msra.mxu0 0
        %731 = vmatprep.subr.bf16.mxu0 0
        %732 = vmatpush2.bf16.msra.mxu0 0
        %733 = vmatprep.subr.bf16.mxu0 0
        %734 = vmatpush2.bf16.msra.mxu0 0
        %735 = vmatprep.subr.bf16.mxu0 0
        %736 = vmatpush2.bf16.msra.mxu0 0
        %737 = vmatprep.subr.bf16.mxu0 0
        %738 = vmatpush2.bf16.msra.mxu0 0
        %739 = vmatprep.mubr.bf16.mxu0 0
        %740 = vmatmul.mubr.bf16.gmra.mxu0 %v655
        %v741 = vpop.f32.mrf.mxu0
        %v742 = vadd.f32 0.0, %v741
        %v743 = vpop.f32.mrf.mxu0
        %v744 = vpop.f32.mrf.mxu0
        %v745 = vpop.f32.mrf.mxu0
        %746 = vdwg.mxu0
        %v747 = vadd.f32 %v640, %v701
        %v748 = vadd.f32 %v641, %v703
        %v749 = vadd.f32 %v642, %v742
        %s750 = scalar_lea.vmem %s1, 20
        %v751 = vld [vmem:[%s750] sm:$0xf]
        %752 = vrot.lane.b32.xlu0 %v220, 108
        %v753 = vpop.permute.xlu0 %752
        %754 = vrot.lane.b32.xlu0 %v228, 108
        %v755 = vpop.permute.xlu0 %754
        %756 = vrot.lane.b32.xlu0 %v227, 108
        %v757 = vpop.permute.xlu0 %756
        %vm758 = vcmask 883712
        %v759 = vsel %vm758, %v753, %v755
        %v760 = vsel %vm758, %v755, %v757
        %v762 = vsel %vm238, %v751, 0
        %v765 = vand.u32 %v759, %v245
        %v768 = vand.u32 %v760, %v245
        %v771 = vand.u32 %v757, %v245
        %773 = vmatprep.subr.bf16.mxu0 0
        %774 = vmatpush1.bf16.msra.mxu0 0
        %775 = vmatprep.subr.bf16.mxu0 0
        %776 = vmatpush1.bf16.msra.mxu0 0
        %777 = vmatprep.subr.bf16.mxu0 0
        %778 = vmatpush1.bf16.msra.mxu0 0
        %779 = vmatprep.subr.bf16.mxu0 0
        %780 = vmatpush1.bf16.msra.mxu0 0
        %781 = vmatprep.subr.bf16.mxu0 0
        %782 = vmatpush1.bf16.msra.mxu0 0
        %783 = vmatprep.subr.bf16.mxu0 0
        %784 = vmatpush1.bf16.msra.mxu0 0
        %785 = vmatprep.subr.bf16.mxu0 0
        %786 = vmatpush1.bf16.msra.mxu0 0
        %787 = vmatprep.subr.bf16.mxu0 %v768
        %788 = vmatpush1.bf16.msra.mxu0 %v765
        %789 = vmatprep.subr.bf16.mxu0 0
        %790 = vmatpush2.bf16.msra.mxu0 0
        %791 = vmatprep.subr.bf16.mxu0 0
        %792 = vmatpush2.bf16.msra.mxu0 0
        %793 = vmatprep.subr.bf16.mxu0 0
        %794 = vmatpush2.bf16.msra.mxu0 0
        %795 = vmatprep.subr.bf16.mxu0 0
        %796 = vmatpush2.bf16.msra.mxu0 0
        %797 = vmatprep.subr.bf16.mxu0 0
        %798 = vmatpush2.bf16.msra.mxu0 0
        %799 = vmatprep.subr.bf16.mxu0 0
        %800 = vmatpush2.bf16.msra.mxu0 0
        %801 = vmatprep.subr.bf16.mxu0 0
        %802 = vmatpush2.bf16.msra.mxu0 0
        %803 = vmatprep.subr.bf16.mxu0 0
        %804 = vmatpush2.bf16.msra.mxu0 0
        %805 = vmatprep.mubr.bf16.mxu0 0
        %806 = vmatmul.mubr.bf16.gmra.mxu0 %v762
        %v807 = vpop.f32.mrf.mxu0
        %v808 = vadd.f32 0.0, %v807
        %v809 = vpop.f32.mrf.mxu0
        %v810 = vadd.f32 0.0, %v809
        %v811 = vpop.f32.mrf.mxu0
        %v812 = vpop.f32.mrf.mxu0
        %813 = vdwg.mxu0
        %814 = vmatprep.subr.bf16.mxu0 0
        %815 = vmatpush1.bf16.msra.mxu0 0
        %816 = vmatprep.subr.bf16.mxu0 0
        %817 = vmatpush1.bf16.msra.mxu0 0
        %818 = vmatprep.subr.bf16.mxu0 0
        %819 = vmatpush1.bf16.msra.mxu0 0
        %820 = vmatprep.subr.bf16.mxu0 0
        %821 = vmatpush1.bf16.msra.mxu0 0
        %822 = vmatprep.subr.bf16.mxu0 0
        %823 = vmatpush1.bf16.msra.mxu0 0
        %824 = vmatprep.subr.bf16.mxu0 0
        %825 = vmatpush1.bf16.msra.mxu0 0
        %826 = vmatprep.subr.bf16.mxu0 0
        %827 = vmatpush1.bf16.msra.mxu0 0
        %828 = vmatprep.subr.bf16.mxu0 0
        %829 = vmatpush1.bf16.msra.mxu0 %v771
        %830 = vmatprep.subr.bf16.mxu0 0
        %831 = vmatpush2.bf16.msra.mxu0 0
        %832 = vmatprep.subr.bf16.mxu0 0
        %833 = vmatpush2.bf16.msra.mxu0 0
        %834 = vmatprep.subr.bf16.mxu0 0
        %835 = vmatpush2.bf16.msra.mxu0 0
        %836 = vmatprep.subr.bf16.mxu0 0
        %837 = vmatpush2.bf16.msra.mxu0 0
        %838 = vmatprep.subr.bf16.mxu0 0
        %839 = vmatpush2.bf16.msra.mxu0 0
        %840 = vmatprep.subr.bf16.mxu0 0
        %841 = vmatpush2.bf16.msra.mxu0 0
        %842 = vmatprep.subr.bf16.mxu0 0
        %843 = vmatpush2.bf16.msra.mxu0 0
        %844 = vmatprep.subr.bf16.mxu0 0
        %845 = vmatpush2.bf16.msra.mxu0 0
        %846 = vmatprep.mubr.bf16.mxu0 0
        %847 = vmatmul.mubr.bf16.gmra.mxu0 %v762
        %v848 = vpop.f32.mrf.mxu0
        %v849 = vadd.f32 0.0, %v848
        %v850 = vpop.f32.mrf.mxu0
        %v851 = vpop.f32.mrf.mxu0
        %v852 = vpop.f32.mrf.mxu0
        %853 = vdwg.mxu0
        %v854 = vadd.f32 %v747, %v808
        %v855 = vadd.f32 %v748, %v810
        %v856 = vadd.f32 %v749, %v849
        %s857 = scalar_lea.vmem %s1, 24
        %v858 = vld [vmem:[%s857] sm:$0xf]
        %v859 = vcombine.high %v227, %v227
        %860 = vrot.lane.b32.xlu0 %v220, 92
        %v861 = vpop.permute.xlu0 %860
        %862 = vrot.lane.b32.xlu0 %v228, 92
        %v863 = vpop.permute.xlu0 %862
        %864 = vrot.lane.b32.xlu0 %v227, 92
        %v865 = vpop.permute.xlu0 %864
        %866 = vrot.lane.b32.xlu0 %v859, 92
        %v867 = vpop.permute.xlu0 %866
        %vm868 = vcmask 752640
        %v869 = vsel %vm868, %v861, %v863
        %v870 = vsel %vm868, %v863, %v865
        %v871 = vsel %vm868, %v865, %v867
        %v873 = vsel %vm238, %v858, 0
        %v876 = vand.u32 %v869, %v245
        %v879 = vand.u32 %v870, %v245
        %v882 = vand.u32 %v871, %v245
        %884 = vmatprep.subr.bf16.mxu0 0
        %885 = vmatpush1.bf16.msra.mxu0 0
        %886 = vmatprep.subr.bf16.mxu0 0
        %887 = vmatpush1.bf16.msra.mxu0 0
        %888 = vmatprep.subr.bf16.mxu0 0
        %889 = vmatpush1.bf16.msra.mxu0 0
        %890 = vmatprep.subr.bf16.mxu0 0
        %891 = vmatpush1.bf16.msra.mxu0 0
        %892 = vmatprep.subr.bf16.mxu0 0
        %893 = vmatpush1.bf16.msra.mxu0 0
        %894 = vmatprep.subr.bf16.mxu0 0
        %895 = vmatpush1.bf16.msra.mxu0 0
        %896 = vmatprep.subr.bf16.mxu0 0
        %897 = vmatpush1.bf16.msra.mxu0 0
        %898 = vmatprep.subr.bf16.mxu0 %v879
        %899 = vmatpush1.bf16.msra.mxu0 %v876
        %900 = vmatprep.subr.bf16.mxu0 0
        %901 = vmatpush2.bf16.msra.mxu0 0
        %902 = vmatprep.subr.bf16.mxu0 0
        %903 = vmatpush2.bf16.msra.mxu0 0
        %904 = vmatprep.subr.bf16.mxu0 0
        %905 = vmatpush2.bf16.msra.mxu0 0
        %906 = vmatprep.subr.bf16.mxu0 0
        %907 = vmatpush2.bf16.msra.mxu0 0
        %908 = vmatprep.subr.bf16.mxu0 0
        %909 = vmatpush2.bf16.msra.mxu0 0
        %910 = vmatprep.subr.bf16.mxu0 0
        %911 = vmatpush2.bf16.msra.mxu0 0
        %912 = vmatprep.subr.bf16.mxu0 0
        %913 = vmatpush2.bf16.msra.mxu0 0
        %914 = vmatprep.subr.bf16.mxu0 0
        %915 = vmatpush2.bf16.msra.mxu0 0
        %916 = vmatprep.mubr.bf16.mxu0 0
        %917 = vmatmul.mubr.bf16.gmra.mxu0 %v873
        %v918 = vpop.f32.mrf.mxu0
        %v919 = vadd.f32 0.0, %v918
        %v920 = vpop.f32.mrf.mxu0
        %v921 = vadd.f32 0.0, %v920
        %v922 = vpop.f32.mrf.mxu0
        %v923 = vpop.f32.mrf.mxu0
        %924 = vdwg.mxu0
        %925 = vmatprep.subr.bf16.mxu0 0
        %926 = vmatpush1.bf16.msra.mxu0 0
        %927 = vmatprep.subr.bf16.mxu0 0
        %928 = vmatpush1.bf16.msra.mxu0 0
        %929 = vmatprep.subr.bf16.mxu0 0
        %930 = vmatpush1.bf16.msra.mxu0 0
        %931 = vmatprep.subr.bf16.mxu0 0
        %932 = vmatpush1.bf16.msra.mxu0 0
        %933 = vmatprep.subr.bf16.mxu0 0
        %934 = vmatpush1.bf16.msra.mxu0 0
        %935 = vmatprep.subr.bf16.mxu0 0
        %936 = vmatpush1.bf16.msra.mxu0 0
        %937 = vmatprep.subr.bf16.mxu0 0
        %938 = vmatpush1.bf16.msra.mxu0 0
        %939 = vmatprep.subr.bf16.mxu0 0
        %940 = vmatpush1.bf16.msra.mxu0 %v882
        %941 = vmatprep.subr.bf16.mxu0 0
        %942 = vmatpush2.bf16.msra.mxu0 0
        %943 = vmatprep.subr.bf16.mxu0 0
        %944 = vmatpush2.bf16.msra.mxu0 0
        %945 = vmatprep.subr.bf16.mxu0 0
        %946 = vmatpush2.bf16.msra.mxu0 0
        %947 = vmatprep.subr.bf16.mxu0 0
        %948 = vmatpush2.bf16.msra.mxu0 0
        %949 = vmatprep.subr.bf16.mxu0 0
        %950 = vmatpush2.bf16.msra.mxu0 0
        %951 = vmatprep.subr.bf16.mxu0 0
        %952 = vmatpush2.bf16.msra.mxu0 0
        %953 = vmatprep.subr.bf16.mxu0 0
        %954 = vmatpush2.bf16.msra.mxu0 0
        %955 = vmatprep.subr.bf16.mxu0 0
        %956 = vmatpush2.bf16.msra.mxu0 0
        %957 = vmatprep.mubr.bf16.mxu0 0
        %958 = vmatmul.mubr.bf16.gmra.mxu0 %v873
        %v959 = vpop.f32.mrf.mxu0
        %v960 = vadd.f32 0.0, %v959
        %v961 = vpop.f32.mrf.mxu0
        %v962 = vpop.f32.mrf.mxu0
        %v963 = vpop.f32.mrf.mxu0
        %964 = vdwg.mxu0
        %v965 = vadd.f32 %v854, %v919
        %v966 = vadd.f32 %v855, %v921
        %v967 = vadd.f32 %v856, %v960
        %s968 = scalar_lea.vmem %s1, 28
        %v969 = vld [vmem:[%s968] sm:$0xf]
        %970 = vrot.lane.b32.xlu0 %v220, 91
        %v971 = vpop.permute.xlu0 %970
        %972 = vrot.lane.b32.xlu0 %v228, 91
        %v973 = vpop.permute.xlu0 %972
        %974 = vrot.lane.b32.xlu0 %v227, 91
        %v975 = vpop.permute.xlu0 %974
        %976 = vrot.lane.b32.xlu0 %v859, 91
        %v977 = vpop.permute.xlu0 %976
        %vm978 = vcmask 744448
        %v979 = vsel %vm978, %v971, %v973
        %v980 = vsel %vm978, %v973, %v975
        %v981 = vsel %vm978, %v975, %v977
        %v983 = vsel %vm238, %v969, 0
        %v986 = vand.u32 %v979, %v245
        %v989 = vand.u32 %v980, %v245
        %v992 = vand.u32 %v981, %v245
        %994 = vmatprep.subr.bf16.mxu0 0
        %995 = vmatpush1.bf16.msra.mxu0 0
        %996 = vmatprep.subr.bf16.mxu0 0
        %997 = vmatpush1.bf16.msra.mxu0 0
        %998 = vmatprep.subr.bf16.mxu0 0
        %999 = vmatpush1.bf16.msra.mxu0 0
        %1000 = vmatprep.subr.bf16.mxu0 0
        %1001 = vmatpush1.bf16.msra.mxu0 0
        %1002 = vmatprep.subr.bf16.mxu0 0
        %1003 = vmatpush1.bf16.msra.mxu0 0
        %1004 = vmatprep.subr.bf16.mxu0 0
        %1005 = vmatpush1.bf16.msra.mxu0 0
        %1006 = vmatprep.subr.bf16.mxu0 0
        %1007 = vmatpush1.bf16.msra.mxu0 0
        %1008 = vmatprep.subr.bf16.mxu0 %v989
        %1009 = vmatpush1.bf16.msra.mxu0 %v986
        %1010 = vmatprep.subr.bf16.mxu0 0
        %1011 = vmatpush2.bf16.msra.mxu0 0
        %1012 = vmatprep.subr.bf16.mxu0 0
        %1013 = vmatpush2.bf16.msra.mxu0 0
        %1014 = vmatprep.subr.bf16.mxu0 0
        %1015 = vmatpush2.bf16.msra.mxu0 0
        %1016 = vmatprep.subr.bf16.mxu0 0
        %1017 = vmatpush2.bf16.msra.mxu0 0
        %1018 = vmatprep.subr.bf16.mxu0 0
        %1019 = vmatpush2.bf16.msra.mxu0 0
        %1020 = vmatprep.subr.bf16.mxu0 0
        %1021 = vmatpush2.bf16.msra.mxu0 0
        %1022 = vmatprep.subr.bf16.mxu0 0
        %1023 = vmatpush2.bf16.msra.mxu0 0
        %1024 = vmatprep.subr.bf16.mxu0 0
        %1025 = vmatpush2.bf16.msra.mxu0 0
        %1026 = vmatprep.mubr.bf16.mxu0 0
        %1027 = vmatmul.mubr.bf16.gmra.mxu0 %v983
        %v1028 = vpop.f32.mrf.mxu0
        %v1029 = vadd.f32 0.0, %v1028
        %v1030 = vpop.f32.mrf.mxu0
        %v1031 = vadd.f32 0.0, %v1030
        %v1032 = vpop.f32.mrf.mxu0
        %v1033 = vpop.f32.mrf.mxu0
        %1034 = vdwg.mxu0
        %1035 = vmatprep.subr.bf16.mxu0 0
        %1036 = vmatpush1.bf16.msra.mxu0 0
        %1037 = vmatprep.subr.bf16.mxu0 0
        %1038 = vmatpush1.bf16.msra.mxu0 0
        %1039 = vmatprep.subr.bf16.mxu0 0
        %1040 = vmatpush1.bf16.msra.mxu0 0
        %1041 = vmatprep.subr.bf16.mxu0 0
        %1042 = vmatpush1.bf16.msra.mxu0 0
        %1043 = vmatprep.subr.bf16.mxu0 0
        %1044 = vmatpush1.bf16.msra.mxu0 0
        %1045 = vmatprep.subr.bf16.mxu0 0
        %1046 = vmatpush1.bf16.msra.mxu0 0
        %1047 = vmatprep.subr.bf16.mxu0 0
        %1048 = vmatpush1.bf16.msra.mxu0 0
        %1049 = vmatprep.subr.bf16.mxu0 0
        %1050 = vmatpush1.bf16.msra.mxu0 %v992
        %1051 = vmatprep.subr.bf16.mxu0 0
        %1052 = vmatpush2.bf16.msra.mxu0 0
        %1053 = vmatprep.subr.bf16.mxu0 0
        %1054 = vmatpush2.bf16.msra.mxu0 0
        %1055 = vmatprep.subr.bf16.mxu0 0
        %1056 = vmatpush2.bf16.msra.mxu0 0
        %1057 = vmatprep.subr.bf16.mxu0 0
        %1058 = vmatpush2.bf16.msra.mxu0 0
        %1059 = vmatprep.subr.bf16.mxu0 0
        %1060 = vmatpush2.bf16.msra.mxu0 0
        %1061 = vmatprep.subr.bf16.mxu0 0
        %1062 = vmatpush2.bf16.msra.mxu0 0
        %1063 = vmatprep.subr.bf16.mxu0 0
        %1064 = vmatpush2.bf16.msra.mxu0 0
        %1065 = vmatprep.subr.bf16.mxu0 0
        %1066 = vmatpush2.bf16.msra.mxu0 0
        %1067 = vmatprep.mubr.bf16.mxu0 0
        %1068 = vmatmul.mubr.bf16.gmra.mxu0 %v983
        %v1069 = vpop.f32.mrf.mxu0
        %v1070 = vadd.f32 0.0, %v1069
        %v1071 = vpop.f32.mrf.mxu0
        %v1072 = vpop.f32.mrf.mxu0
        %v1073 = vpop.f32.mrf.mxu0
        %1074 = vdwg.mxu0
        %v1075 = vadd.f32 %v965, %v1029
        %v1076 = vadd.f32 %v966, %v1031
        %v1077 = vadd.f32 %v967, %v1070
        %s1078 = scalar_lea.vmem %s1, 32
        %v1079 = vld [vmem:[%s1078] sm:$0xf]
        %1080 = vrot.lane.b32.xlu0 %v220, 90
        %v1081 = vpop.permute.xlu0 %1080
        %1082 = vrot.lane.b32.xlu0 %v228, 90
        %v1083 = vpop.permute.xlu0 %1082
        %1084 = vrot.lane.b32.xlu0 %v227, 90
        %v1085 = vpop.permute.xlu0 %1084
        %1086 = vrot.lane.b32.xlu0 %v859, 90
        %v1087 = vpop.permute.xlu0 %1086
        %vm1088 = vcmask 736256
        %v1089 = vsel %vm1088, %v1081, %v1083
        %v1090 = vsel %vm1088, %v1083, %v1085
        %v1091 = vsel %vm1088, %v1085, %v1087
        %v1093 = vsel %vm238, %v1079, 0
        %v1096 = vand.u32 %v1089, %v245
        %v1099 = vand.u32 %v1090, %v245
        %v1102 = vand.u32 %v1091, %v245
        %1104 = vmatprep.subr.bf16.mxu0 0
        %1105 = vmatpush1.bf16.msra.mxu0 0
        %1106 = vmatprep.subr.bf16.mxu0 0
        %1107 = vmatpush1.bf16.msra.mxu0 0
        %1108 = vmatprep.subr.bf16.mxu0 0
        %1109 = vmatpush1.bf16.msra.mxu0 0
        %1110 = vmatprep.subr.bf16.mxu0 0
        %1111 = vmatpush1.bf16.msra.mxu0 0
        %1112 = vmatprep.subr.bf16.mxu0 0
        %1113 = vmatpush1.bf16.msra.mxu0 0
        %1114 = vmatprep.subr.bf16.mxu0 0
        %1115 = vmatpush1.bf16.msra.mxu0 0
        %1116 = vmatprep.subr.bf16.mxu0 0
        %1117 = vmatpush1.bf16.msra.mxu0 0
        %1118 = vmatprep.subr.bf16.mxu0 %v1099
        %1119 = vmatpush1.bf16.msra.mxu0 %v1096
        %1120 = vmatprep.subr.bf16.mxu0 0
        %1121 = vmatpush2.bf16.msra.mxu0 0
        %1122 = vmatprep.subr.bf16.mxu0 0
        %1123 = vmatpush2.bf16.msra.mxu0 0
        %1124 = vmatprep.subr.bf16.mxu0 0
        %1125 = vmatpush2.bf16.msra.mxu0 0
        %1126 = vmatprep.subr.bf16.mxu0 0
        %1127 = vmatpush2.bf16.msra.mxu0 0
        %1128 = vmatprep.subr.bf16.mxu0 0
        %1129 = vmatpush2.bf16.msra.mxu0 0
        %1130 = vmatprep.subr.bf16.mxu0 0
        %1131 = vmatpush2.bf16.msra.mxu0 0
        %1132 = vmatprep.subr.bf16.mxu0 0
        %1133 = vmatpush2.bf16.msra.mxu0 0
        %1134 = vmatprep.subr.bf16.mxu0 0
        %1135 = vmatpush2.bf16.msra.mxu0 0
        %1136 = vmatprep.mubr.bf16.mxu0 0
        %1137 = vmatmul.mubr.bf16.gmra.mxu0 %v1093
        %v1138 = vpop.f32.mrf.mxu0
        %v1139 = vadd.f32 0.0, %v1138
        %v1140 = vpop.f32.mrf.mxu0
        %v1141 = vadd.f32 0.0, %v1140
        %v1142 = vpop.f32.mrf.mxu0
        %v1143 = vpop.f32.mrf.mxu0
        %1144 = vdwg.mxu0
        %1145 = vmatprep.subr.bf16.mxu0 0
        %1146 = vmatpush1.bf16.msra.mxu0 0
        %1147 = vmatprep.subr.bf16.mxu0 0
        %1148 = vmatpush1.bf16.msra.mxu0 0
        %1149 = vmatprep.subr.bf16.mxu0 0
        %1150 = vmatpush1.bf16.msra.mxu0 0
        %1151 = vmatprep.subr.bf16.mxu0 0
        %1152 = vmatpush1.bf16.msra.mxu0 0
        %1153 = vmatprep.subr.bf16.mxu0 0
        %1154 = vmatpush1.bf16.msra.mxu0 0
        %1155 = vmatprep.subr.bf16.mxu0 0
        %1156 = vmatpush1.bf16.msra.mxu0 0
        %1157 = vmatprep.subr.bf16.mxu0 0
        %1158 = vmatpush1.bf16.msra.mxu0 0
        %1159 = vmatprep.subr.bf16.mxu0 0
        %1160 = vmatpush1.bf16.msra.mxu0 %v1102
        %1161 = vmatprep.subr.bf16.mxu0 0
        %1162 = vmatpush2.bf16.msra.mxu0 0
        %1163 = vmatprep.subr.bf16.mxu0 0
        %1164 = vmatpush2.bf16.msra.mxu0 0
        %1165 = vmatprep.subr.bf16.mxu0 0
        %1166 = vmatpush2.bf16.msra.mxu0 0
        %1167 = vmatprep.subr.bf16.mxu0 0
        %1168 = vmatpush2.bf16.msra.mxu0 0
        %1169 = vmatprep.subr.bf16.mxu0 0
        %1170 = vmatpush2.bf16.msra.mxu0 0
        %1171 = vmatprep.subr.bf16.mxu0 0
        %1172 = vmatpush2.bf16.msra.mxu0 0
        %1173 = vmatprep.subr.bf16.mxu0 0
        %1174 = vmatpush2.bf16.msra.mxu0 0
        %1175 = vmatprep.subr.bf16.mxu0 0
        %1176 = vmatpush2.bf16.msra.mxu0 0
        %1177 = vmatprep.mubr.bf16.mxu0 0
        %1178 = vmatmul.mubr.bf16.gmra.mxu0 %v1093
        %v1179 = vpop.f32.mrf.mxu0
        %v1180 = vadd.f32 0.0, %v1179
        %v1181 = vpop.f32.mrf.mxu0
        %v1182 = vpop.f32.mrf.mxu0
        %v1183 = vpop.f32.mrf.mxu0
        %1184 = vdwg.mxu0
        %v1185 = vadd.f32 %v1075, %v1139
        %v1186 = vadd.f32 %v1076, %v1141
        %v1187 = vadd.f32 %v1077, %v1180
        %v1188 = vld [vmem:[%s2] sm:$0xff]
        %1190 = vset.pattern.permute.xlu0 0
        %1191 = vperm.xlu0 %1190, %v1188
        %v1192 = vpop.permute.xlu0 %1191
        %v1194 = vadd.f32 %v1185, %v1192
        %v1195 = vadd.f32 %v1186, %v1192
        %v1196 = vadd.f32 %v1187, %v1192
        %v1197 = vmax.f32 %v1194, 0.0
        %v1198 = vmax.f32 %v1195, 0.0
        %v1199 = vmax.f32 %v1196, 0.0
        %v1200 = vlaneseq
        %v1201 = vand.u32 %v1200, 127
        %v1202 = vadd.s32 %v1201, 128
        %v1203 = vadd.s32 %v1201, 256
        %v1204 = vsub.s32 %v1201, 38
        %v1205 = vsub.s32 %v1202, 38
        %v1206 = vsub.s32 %v1203, 38
        %v1207 = vadd.s32 %v1201, 16
        %v1208 = vadd.s32 %v1202, 16
        %v1209 = vadd.s32 %v1203, 16
        %vm1210 = vcmp.lt.s32.totalorder %v1207, 0
        %v1211 = vsub.s32 0, %v1207
        %v1212 = vsel %vm1210, %v1211, %v1207
        %v1213 = vmul.u32.u64.compose %v1212, 3817748708
        %v1214 = vextract.low.u32 %v1213
        %v1215 = vextract.high.u32 %v1213
        %v1216 = vshrl.u32 %v1215, 4
        %v1217 = vmul.u32 %v1216, 18
        %v1218 = vsub.s32 %v1212, %v1217
        %v1219 = vsub.s32 0, %v1218
        %v1220 = vsel %vm1210, %v1219, %v1218
        %vm1221 = vcmp.lt.s32.totalorder %v1208, 0
        %v1222 = vsub.s32 0, %v1208
        %v1223 = vsel %vm1221, %v1222, %v1208
        %v1224 = vmul.u32.u64.compose %v1223, 3817748708
        %v1225 = vextract.low.u32 %v1224
        %v1226 = vextract.high.u32 %v1224
        %v1227 = vshrl.u32 %v1226, 4
        %v1228 = vmul.u32 %v1227, 18
        %v1229 = vsub.s32 %v1223, %v1228
        %v1230 = vsub.s32 0, %v1229
        %v1231 = vsel %vm1221, %v1230, %v1229
        %vm1232 = vcmp.lt.s32.totalorder %v1209, 0
        %v1233 = vsub.s32 0, %v1209
        %v1234 = vsel %vm1232, %v1233, %v1209
        %v1235 = vmul.u32.u64.compose %v1234, 3817748708
        %v1236 = vextract.low.u32 %v1235
        %v1237 = vextract.high.u32 %v1235
        %v1238 = vshrl.u32 %v1237, 4
        %v1239 = vmul.u32 %v1238, 18
        %v1240 = vsub.s32 %v1234, %v1239
        %v1241 = vsub.s32 0, %v1240
        %v1242 = vsel %vm1232, %v1241, %v1240
        %vm1243 = vcmp.ne.s32.totalorder %v1220, 0
        %vm1244 = vcmp.ne.s32.totalorder %v1231, 0
        %vm1245 = vcmp.ne.s32.totalorder %v1242, 0
        %vm1246 = vcmp.lt.s32.totalorder %v1220, 0
        %vm1247 = vcmp.lt.s32.totalorder %v1231, 0
        %vm1248 = vcmp.lt.s32.totalorder %v1242, 0
        %vm1249 = vmand %vm1246, %vm1243
        %vm1250 = vmand %vm1247, %vm1244
        %vm1251 = vmand %vm1248, %vm1245
        %v1252 = vadd.s32 %v1220, 18
        %v1253 = vadd.s32 %v1231, 18
        %v1254 = vadd.s32 %v1242, 18
        %v1255 = vsel %vm1249, %v1252, %v1220
        %v1256 = vsel %vm1250, %v1253, %v1231
        %v1257 = vsel %vm1251, %v1254, %v1242
        %vm1258 = vcmp.ge.s32.totalorder %v1204, 0
        %vm1259 = vcmp.ge.s32.totalorder %v1205, 0
        %vm1260 = vcmp.ge.s32.totalorder %v1206, 0
        %vm1261 = vcmp.lt.s32.totalorder %v1204, 288
        %vm1262 = vcmp.lt.s32.totalorder %v1205, 288
        %vm1263 = vcmp.lt.s32.totalorder %v1206, 288
        %vm1264 = vmand %vm1258, %vm1261
        %vm1265 = vmand %vm1259, %vm1262
        %vm1266 = vmand %vm1260, %vm1263
        %vm1267 = vcmp.lt.s32.totalorder %v1255, 16
        %vm1268 = vcmp.lt.s32.totalorder %v1256, 16
        %vm1269 = vcmp.lt.s32.totalorder %v1257, 16
        %vm1270 = vmand %vm1264, %vm1267
        %vm1271 = vmand %vm1265, %vm1268
        %vm1272 = vmand %vm1266, %vm1269
        %v1273 = vsel %vm1270, 1, 0
        %v1274 = vsel %vm1271, 1, 0
        %v1275 = vsel %vm1272, 1, 0
        %v1276 = vcvt.s32.f32 %v1273
        %v1277 = vcvt.s32.f32 %v1274
        %v1278 = vcvt.s32.f32 %v1275
        %v1279 = vmul.f32 %v1197, %v1276
        %v1280 = vmul.f32 %v1198, %v1277
        %v1281 = vmul.f32 %v1199, %v1278
        %v1282 = vpack.c.bf16 %v1279, %v1279
        %v1283 = vpack.c.bf16 %v1280, %v1280
        %v1284 = vpack.c.bf16 %v1281, %v1281
        %v1288 = vunpack.c.l.b16 %v1282
        %v1289 = vunpack.c.l.b16 %v1283
        %v1290 = vunpack.c.l.b16 %v1284
        %v1291 = vpack.c.b16 %v1289, %v1288
        %v1292 = vpack.c.b16 %v1290, %v1290
        %1295 = vst [vmem:[%s194] sm:$0xff] %v1291
        %vm1296 = vcmask 863232
        %1297 = vst.msk [vmem:[%s194 + $0x8] sm:$0xf] %vm1296, %v1292
        %v1298 = vmul.f32 %v1279, %v1279
        %v1299 = vmul.f32 %v1280, %v1280
        %v1300 = vmul.f32 %v1281, %v1281
        %v1301 = vrot.slane %v1298, 4
        %v1302 = vadd.f32 %v1298, %v1301
        %v1303 = vrot.slane %v1302, 2
        %v1304 = vadd.f32 %v1302, %v1303
        %v1305 = vrot.slane %v1304, 1
        %v1306 = vadd.f32 %v1304, %v1305
        %v1307 = vrot.slane %v1299, 4
        %v1308 = vadd.f32 %v1299, %v1307
        %v1309 = vrot.slane %v1308, 2
        %v1310 = vadd.f32 %v1308, %v1309
        %v1311 = vrot.slane %v1310, 1
        %v1312 = vadd.f32 %v1310, %v1311
        %vm1313 = vcmask 867328
        %v1314 = vsel %vm1313, %v1300, 0.0
        %v1315 = vrot.slane %v1314, 4
        %v1316 = vadd.f32 %v1314, %v1315
        %v1317 = vrot.slane %v1316, 2
        %v1318 = vadd.f32 %v1316, %v1317
        %v1319 = vrot.slane %v1318, 1
        %v1320 = vadd.f32 %v1318, %v1319
        %v1321 = vrsqrt.pop %v1306
        %v1322 = vmul.f32 %v1306, %v1321
        %vm1323 = vcmp.eq.f32.partialorder %v1306, inf
        %v1324 = vsel %vm1323, %v1306, %v1322
        %vm1325 = vcmp.eq.f32.partialorder %v1306, 0.0
        %v1326 = vand.u32 %v1306, 2147483648
        %v1327 = vsel %vm1325, %v1326, %v1324
        %v1328 = vrsqrt.pop %v1312
        %v1329 = vmul.f32 %v1312, %v1328
        %vm1330 = vcmp.eq.f32.partialorder %v1312, inf
        %v1331 = vsel %vm1330, %v1312, %v1329
        %vm1332 = vcmp.eq.f32.partialorder %v1312, 0.0
        %v1333 = vand.u32 %v1312, 2147483648
        %v1334 = vsel %vm1332, %v1333, %v1331
        %v1335 = vrsqrt.pop %v1320
        %v1336 = vmul.f32 %v1320, %v1335
        %vm1337 = vcmp.eq.f32.partialorder %v1320, inf
        %v1338 = vsel %vm1337, %v1320, %v1336
        %vm1339 = vcmp.eq.f32.partialorder %v1320, 0.0
        %v1340 = vand.u32 %v1320, 2147483648
        %v1341 = vsel %vm1339, %v1340, %v1338
        %v1342 = vadd.f32 %v1327, 1e-10
        %v1343 = vadd.f32 %v1334, 1e-10
        %v1344 = vadd.f32 %v1341, 1e-10
        %v1345 = vrcp.pop %v1342
        %v1346 = vrcp.pop %v1343
        %v1347 = vrcp.pop %v1344
        %v1348 = vmul.f32 %v1342, %v1345
        %v1349 = vmul.f32 %v1343, %v1346
        %v1350 = vmul.f32 %v1344, %v1347
        %v1351 = vsub.f32 2.0, %v1348
        %v1352 = vsub.f32 2.0, %v1349
        %v1353 = vsub.f32 2.0, %v1350
        %v1354 = vmul.f32 %v1345, %v1351
        %v1355 = vmul.f32 %v1346, %v1352
        %v1356 = vmul.f32 %v1347, %v1353
        %v1357 = vmul.f32 %v1279, %v1354
        %v1358 = vmul.f32 %v1280, %v1355
        %v1359 = vmul.f32 %v1281, %v1356
        %1360 = vst [vmem:[%s201] sm:$0xff] %v1357
        %1361 = vst [vmem:[%s201 + $0x8] sm:$0xff] %v1358
        %1362 = vst.msk [vmem:[%s201 + $0x10] sm:$0xff] %vm1313, %v1359
        %s1363 = sand.u32 %s98, 1
        %s1364 = scalar_lea.sflag [#allocation3], %s1363
        %s1365 = sand.u32 %s98, 1
        %s1366 = smul.addr %s1365, 12
        %s1367 = scalar_lea.vmem [#allocation2], %s1366
        %s1368 = sand.u32 %s124, 1
        %s1369 = scalar_lea.sflag [#allocation5], %s1368
        %s1370 = sand.u32 %s124, 1
        %s1371 = smul.addr %s1370, 24
        %s1372 = scalar_lea.vmem [#allocation4], %s1371
        // Predicated region
        $region33: #{tpu_custom_call.1} parent=31 // pred_check
          %p1373 = pneg %p108
        $region34: #{tpu_custom_call.1} parent=31 // pred_check_branch
          %1375 = sbr.rel (%p1373) target = $region36
        $region35: #{tpu_custom_call.1} parent=31 // pred_region
          %s1377 = ssub.s32 192, 192
          %1378 = vsyncadd %s1364, %s1377
          %s1379 = smul.addr %s22, 3
          %s1380 = smul.addr %s1379, 64
          %s1381 = scalar_lea.hbm %s3, %s1380
          %s1383 = sshll.u32 %s1367, 4
          %s1384 = int_to_ptr.vmem [resolvable:$true] %s1383
          %1386 = dma.vmem_to_hbm [thread:$0]  %s1384, 192, %s1381, %s1364
        $region36: #{tpu_custom_call.1} parent=31 // pred_fallthru
          _
        // Predicated region
        $region37: #{tpu_custom_call.1} parent=31 // pred_check
          %p1387 = pneg %p134
        $region38: #{tpu_custom_call.1} parent=31 // pred_check_branch
          %1389 = sbr.rel (%p1387) target = $region40
        $region39: #{tpu_custom_call.1} parent=31 // pred_region
          %s1391 = ssub.s32 384, 384
          %1392 = vsyncadd %s1369, %s1391
          %s1393 = smul.addr %s22, 3
          %s1394 = smul.addr %s1393, 128
          %s1395 = scalar_lea.hbm %s4, %s1394
          %s1397 = sshll.u32 %s1372, 4
          %s1398 = int_to_ptr.vmem [resolvable:$true] %s1397
          %1400 = dma.vmem_to_hbm [thread:$0]  %s1398, 384, %s1395, %s1369
        $region40: #{tpu_custom_call.1} parent=31 // pred_fallthru
          _
      $region32: #{tpu_custom_call.1} parent=5 // pred_fallthru
        _
      %p1401 = scmp.le.s32.totalorder 2, %s17
      // Predicated region
      $region41: #{tpu_custom_call.1} parent=5 // pred_check
        %p1402 = pneg %p1401
      $region42: #{tpu_custom_call.1} parent=5 // pred_check_branch
        %1404 = sbr.rel (%p1402) target = $region44
      $region43: #{tpu_custom_call.1} parent=5 // pred_region
        %s1405 = ssub.s32 %s17, 2
        // Predicated region
        $region45: #{tpu_custom_call.1} parent=43 // pred_check
          %p1406 = pneg %p114
        $region46: #{tpu_custom_call.1} parent=43 // pred_check_branch
          %1408 = sbr.rel (%p1406) target = $region48
        $region47: #{tpu_custom_call.1} parent=43 // pred_region
          %s1409 = sand.u32 %s99, 1
          %s1410 = scalar_lea.sflag [#allocation3], %s1409
          %s1411 = sand.u32 %s99, 1
          %s1412 = smul.addr %s1411, 12
          %s1413 = scalar_lea.vmem [#allocation2], %s1412
          %1414 = dma.done %s1410, 192
        $region48: #{tpu_custom_call.1} parent=43 // pred_fallthru
          _
        // Predicated region
        $region49: #{tpu_custom_call.1} parent=43 // pred_check
          %p1415 = pneg %p140
        $region50: #{tpu_custom_call.1} parent=43 // pred_check_branch
          %1417 = sbr.rel (%p1415) target = $region52
        $region51: #{tpu_custom_call.1} parent=43 // pred_region
          %s1418 = sand.u32 %s125, 1
          %s1419 = scalar_lea.sflag [#allocation5], %s1418
          %s1420 = sand.u32 %s125, 1
          %s1421 = smul.addr %s1420, 24
          %s1422 = scalar_lea.vmem [#allocation4], %s1421
          %1423 = dma.done %s1419, 384
        $region52: #{tpu_custom_call.1} parent=43 // pred_fallthru
          _
      $region44: #{tpu_custom_call.1} parent=5 // pred_fallthru
        _
    $region6: #{tpu_custom_call.1} parent=1 // loop_footer
      %s21 = sadd.s32 1, %s17
    $region7: #{tpu_custom_call.1} parent=1 // loop_footer_branch
      %16 = sbr.rel target = $region3
    $region8: #{tpu_custom_call.1} parent=1 // loop_exit
      _
    %1424 = vsyncpa [#allocation3], 1
    %s1425 = scalar_lea.sflag [#allocation3], 1
    %1426 = vsyncpa %s1425, 1
    %1427 = vsyncpa [#allocation5], 1
    %s1428 = scalar_lea.sflag [#allocation5], 1
    %1429 = vsyncpa %s1428, 1

</llo_original>
